<compile_context>
chip_gen: v5e
topology: v5e:2x2
jax: 0.10.0
libtpu: 0.0.40
codegen_flags: <defaults>
</compile_context>

<pallas_src>
import functools

import jax
import jax.numpy as jnp
from jax.experimental import pallas as pl
from jax.experimental.pallas import tpu as pltpu


def _round_up(x, m):
    return (x + m - 1) // m * m


# ---------------------------------------------------------------------------
# Kernel 1: conv-as-matmul (MXU, bf16 in / f32 acc) + partial BN statistics.
# ---------------------------------------------------------------------------
def _conv_stats_kernel(x_ref, w_ref, y_ref, s_ref):
    # x_ref: (TM, Kp)   bf16  im2col rows for this M-tile
    # w_ref: (Kp, Cp)   bf16  packed weights (tap-major, cin-minor, Cp-padded)
    # y_ref: (TM, Cp)   f32   conv output tile (lane-dense, Cp % 128 == 0)
    # s_ref: (1, 8, Cp) f32   row 0 = partial sum, row 1 = partial sum-of-squares
    acc = jnp.dot(x_ref[...], w_ref[...], preferred_element_type=jnp.float32)
    y_ref[...] = acc
    psum = jnp.sum(acc, axis=0, keepdims=True)           # (1, Cp)
    psq = jnp.sum(acc * acc, axis=0, keepdims=True)      # (1, Cp)
    pad = jnp.zeros((6, acc.shape[1]), jnp.float32)
    s_ref[0] = jnp.concatenate([psum, psq, pad], axis=0)  # (8, Cp)


# ---------------------------------------------------------------------------
# Kernel 2: folded BatchNorm (scale/shift) + ReLU, elementwise, lane-dense.
# ---------------------------------------------------------------------------
def _bn_relu_kernel(y_ref, scale_ref, shift_ref, o_ref):
    o_ref[...] = jnp.maximum(y_ref[...] * scale_ref[...] + shift_ref[...], 0.0)


def basic_conv3d(x, weight, gamma, beta, *, stride=(1, 1, 1),
                 padding=(1, 1, 1), eps=1e-3):
    """x: (N, Cin, D, H, W); weight: (Cout, Cin, KD, KH, KW) (PyTorch layout)."""
    n, cin, D, H, W = x.shape
    cout, cin_w, KD, KH, KW = weight.shape
    assert cin == cin_w
    sd, sh, sw = stride
    pd, ph, pw = padding
    dout = (D + 2 * pd - KD) // sd + 1
    hout = (H + 2 * ph - KH) // sh + 1
    wout = (W + 2 * pw - KW) // sw + 1

    # ---- glue (layout plumbing in plain JAX): NDHWC, zero-pad, im2col -----
    x_ndhwc = jnp.transpose(x, (0, 2, 3, 4, 1))
    x_pad = jnp.pad(x_ndhwc, ((0, 0), (pd, pd), (ph, ph), (pw, pw), (0, 0)))

    taps = []
    for a in range(KD):
        for b in range(KH):
            for c in range(KW):
                taps.append(
                    x_pad[:, a:a + (dout - 1) * sd + 1:sd,
                          b:b + (hout - 1) * sh + 1:sh,
                          c:c + (wout - 1) * sw + 1:sw, :])
    # (N, Dout, Hout, Wout, KD*KH*KW, Cin) -> (M, KD*KH*KW*Cin), tap-major.
    col = jnp.stack(taps, axis=4)
    m_real = n * dout * hout * wout
    kpack = KD * KH * KW * cin
    x_col = col.reshape(m_real, kpack)

    # Packed weights, same column order (tap-major, cin-minor), once, in JAX.
    w_mat = jnp.transpose(weight, (2, 3, 4, 1, 0)).reshape(kpack, cout)

    # Pad to MXU / lane-friendly sizes: K and Cout -> multiples of 128,
    # M -> multiple of the tile size (padded rows are all-zero => conv rows 0,
    # which contribute nothing to the BN sums).
    tm = 512
    if m_real < tm:
        tm = _round_up(m_real, 8)
    mp = _round_up(m_real, tm)
    kp = _round_up(kpack, 128)
    cp = _round_up(cout, 128)

    x_col = jnp.pad(x_col, ((0, mp - m_real), (0, kp - kpack))).astype(jnp.bfloat16)
    w_mat = jnp.pad(w_mat, ((0, kp - kpack), (0, cp - cout))).astype(jnp.bfloat16)

    num_tiles = mp // tm

    conv_out, stats = pl.pallas_call(
        _conv_stats_kernel,
        out_shape=(jax.ShapeDtypeStruct((mp, cp), jnp.float32),
                   jax.ShapeDtypeStruct((num_tiles, 8, cp), jnp.float32)),
        grid=(num_tiles,),
        in_specs=[pl.BlockSpec((tm, kp), lambda i: (i, 0)),
                  pl.BlockSpec((kp, cp), lambda i: (0, 0))],
        out_specs=(pl.BlockSpec((tm, cp), lambda i: (i, 0)),
                   pl.BlockSpec((1, 8, cp), lambda i: (i, 0, 0))),
        compiler_params=pltpu.CompilerParams(
            dimension_semantics=("parallel",)),
    )(x_col, w_mat)

    # ---- tiny per-channel finalize: fold train-mode BN into scale/shift ---
    ch_sum = jnp.sum(stats[:, 0, :], axis=0)              # (Cp,)
    ch_sq = jnp.sum(stats[:, 1, :], axis=0)                # (Cp,)
    mean = ch_sum / m_real
    var = ch_sq / m_real - mean * mean                     # biased (train) var
    gamma_p = jnp.pad(gamma.astype(jnp.float32), (0, cp - cout))
    beta_p = jnp.pad(beta.astype(jnp.float32), (0, cp - cout))
    scale = gamma_p * jax.lax.rsqrt(var + eps)
    shift = beta_p - mean * scale

    out2d = pl.pallas_call(
        _bn_relu_kernel,
        out_shape=jax.ShapeDtypeStruct((mp, cp), jnp.float32),
        grid=(num_tiles,),
        in_specs=[pl.BlockSpec((tm, cp), lambda i: (i, 0)),
                  pl.BlockSpec((1, cp), lambda i: (0, 0)),
                  pl.BlockSpec((1, cp), lambda i: (0, 0))],
        out_specs=pl.BlockSpec((tm, cp), lambda i: (i, 0)),
        input_output_aliases={0: 0},   # reuse conv_out's HBM buffer
        compiler_params=pltpu.CompilerParams(
            dimension_semantics=("parallel",)),
    )(conv_out, scale.reshape(1, cp), shift.reshape(1, cp))

    out = out2d[:m_real, :cout].reshape(n, dout, hout, wout, cout)
    return jnp.transpose(out, (0, 4, 1, 2, 3))             # back to NCDHW


if __name__ == "__main__":
    key = jax.random.PRNGKey(0)
    kx, kw_ = jax.random.split(key)

    # BasicConv3d(in_planes=4, out_planes=8, kernel_size=3, stride=1, padding=1)
    N, Cin, D, H, W = 2, 4, 8, 16, 16
    Cout, K = 8, 3

    x = jax.random.normal(kx, (N, Cin, D, H, W), jnp.float32)
    fan_in = Cin * K * K * K
    weight = jax.random.uniform(kw_, (Cout, Cin, K, K, K), jnp.float32,
                                minval=-1.0, maxval=1.0) / jnp.sqrt(fan_in)
    gamma = jnp.ones((Cout,), jnp.float32)   # BN affine init (weight=1)
    beta = jnp.zeros((Cout,), jnp.float32)   # BN affine init (bias=0)

    fn = jax.jit(functools.partial(basic_conv3d, stride=(1, 1, 1),
                                   padding=(1, 1, 1), eps=1e-3))
    out = jax.block_until_ready(fn(x, weight, gamma, beta))

    # pure-JAX reference: same bf16 input rounding, f32 accumulation, then
    # train-mode BN (biased variance, eps=1e-3) + ReLU in f32.
    ref_conv = jax.lax.conv_general_dilated(
        x.astype(jnp.bfloat16), weight.astype(jnp.bfloat16),
        window_strides=(1, 1, 1), padding=[(1, 1)] * 3,
        dimension_numbers=("NCDHW", "OIDHW", "NCDHW"),
        preferred_element_type=jnp.float32)
    mean = jnp.mean(ref_conv, axis=(0, 2, 3, 4), keepdims=True)
    var = jnp.mean((ref_conv - mean) ** 2, axis=(0, 2, 3, 4), keepdims=True)
    ref = jnp.maximum(
        (ref_conv - mean) * jax.lax.rsqrt(var + 1e-3)
        * gamma.reshape(1, -1, 1, 1, 1) + beta.reshape(1, -1, 1, 1, 1), 0.0)

    assert out.shape == (N, Cout, D, H, W)
    max_err = float(jnp.max(jnp.abs(out - ref)))
    assert jnp.allclose(out, ref, atol=5e-3, rtol=5e-3), max_err
    print("KERNEL_OK")
</pallas_src>

<mosaic_0001>
module attributes {stable_mosaic.version = 11 : i64} {
  func.func @_conv_stats_kernel(%arg0: i32, %arg1: memref<512x128xbf16, #tpu.memory_space<vmem>>, %arg2: memref<128x128xbf16, #tpu.memory_space<vmem>>, %arg3: memref<512x128xf32, #tpu.memory_space<vmem>>, %arg4: memref<1x8x128xf32, #tpu.memory_space<vmem>>) attributes {dimension_semantics = [#tpu.dimension_semantics<parallel>], iteration_bounds = array<i64: 8>, scalar_prefetch = 0 : i64, scratch_operands = 0 : i64, tpu.core_type = #tpu.core_type<tc>, window_params = [{transform_indices = @transform_0, window_bounds = array<i64: 512, 128>}, {pipeline_mode = #tpu.pipeline_mode<synchronous>, transform_indices = @transform_1, window_bounds = array<i64: 128, 128>}, {transform_indices = @transform_2, window_bounds = array<i64: 512, 128>}, {transform_indices = @transform_3, window_bounds = array<i64: 1, 8, 128>}]} {
    %c0 = arith.constant 0 : index
    %c0_0 = arith.constant 0 : index
    %0 = vector.load %arg1[%c0, %c0_0] : memref<512x128xbf16, #tpu.memory_space<vmem>>, vector<512x128xbf16>
    %c0_1 = arith.constant 0 : index
    %c0_2 = arith.constant 0 : index
    %1 = vector.load %arg2[%c0_1, %c0_2] : memref<128x128xbf16, #tpu.memory_space<vmem>>, vector<128x128xbf16>
    %cst = arith.constant dense<0.000000e+00> : vector<512x128xf32>
    %2 = tpu.matmul %0, %1, %cst {dimension_numbers = #tpu.dot_dimension_numbers<[1], [0], [0], [1], [0, 0, 1, 1], [], []>} : vector<512x128xbf16>, vector<128x128xbf16>, vector<512x128xf32> -> vector<512x128xf32>
    %c0_3 = arith.constant 0 : index
    %c0_4 = arith.constant 0 : index
    %3 = vector.load %arg3[%c0_3, %c0_4] : memref<512x128xf32, #tpu.memory_space<vmem>>, vector<512x128xf32>
    tpu.vector_store %arg3[%c0_3, %c0_4], %2 {strides = array<i32>} : memref<512x128xf32, #tpu.memory_space<vmem>>, vector<512x128xf32>,
    %cst_5 = arith.constant dense<0.000000e+00> : vector<128xf32>
    %4 = vector.multi_reduction <add>, %2, %cst_5 [0] : vector<512x128xf32> to vector<128xf32>
    %5 = vector.shape_cast %4 : vector<128xf32> to vector<1x128xf32>
    %6 = arith.mulf %2, %2 : vector<512x128xf32>
    %cst_6 = arith.constant dense<0.000000e+00> : vector<128xf32>
    %7 = vector.multi_reduction <add>, %6, %cst_6 [0] : vector<512x128xf32> to vector<128xf32>
    %8 = vector.shape_cast %7 : vector<128xf32> to vector<1x128xf32>
    %cst_7 = arith.constant 0.000000e+00 : f32
    %9 = vector.broadcast %cst_7 : f32 to vector<6x128xf32>
    %10 = tpu.concatenate %5, %8, %9 in 0 : vector<1x128xf32>, vector<1x128xf32>, vector<6x128xf32> -> vector<8x128xf32>
    %c0_8 = arith.constant 0 : index
    %c0_9 = arith.constant 0 : index
    %c0_10 = arith.constant 0 : index
    %11 = vector.load %arg4[%c0_8, %c0_9, %c0_10] : memref<1x8x128xf32, #tpu.memory_space<vmem>>, vector<1x8x128xf32>
    %12 = vector.shape_cast %11 : vector<1x8x128xf32> to vector<8x128xf32>
    %13 = vector.shape_cast %10 : vector<8x128xf32> to vector<1x8x128xf32>
    tpu.vector_store %arg4[%c0_8, %c0_9, %c0_10], %13 {strides = array<i32>} : memref<1x8x128xf32, #tpu.memory_space<vmem>>, vector<1x8x128xf32>,
    return
  }
  func.func @transform_0(%arg0: i32) -> (i32, i32) {
    %c0_i32 = arith.constant 0 : i32
    %c0_i32_0 = arith.constant 0 : i32
    return %arg0, %c0_i32 : i32, i32
  }
  func.func @transform_1(%arg0: i32) -> (i32, i32) {
    %c0_i32 = arith.constant 0 : i32
    %c0_i32_0 = arith.constant 0 : i32
    %c0_i32_1 = arith.constant 0 : i32
    return %c0_i32, %c0_i32_0 : i32, i32
  }
  func.func @transform_2(%arg0: i32) -> (i32, i32) {
    %c0_i32 = arith.constant 0 : i32
    %c0_i32_0 = arith.constant 0 : i32
    return %arg0, %c0_i32 : i32, i32
  }
  func.func @transform_3(%arg0: i32) -> (i32, i32, i32) {
    %c0_i32 = arith.constant 0 : i32
    %c0_i32_0 = arith.constant 0 : i32
    %c0_i32_1 = arith.constant 0 : i32
    return %arg0, %c0_i32, %c0_i32_0 : i32, i32, i32
  }
}

module attributes {stable_mosaic.version = 11 : i64} {
  func.func @_bn_relu_kernel(%arg0: i32, %arg1: memref<512x128xf32, #tpu.memory_space<vmem>>, %arg2: memref<1x128xf32, #tpu.memory_space<vmem>>, %arg3: memref<1x128xf32, #tpu.memory_space<vmem>>, %arg4: memref<512x128xf32, #tpu.memory_space<vmem>>) attributes {dimension_semantics = [#tpu.dimension_semantics<parallel>], iteration_bounds = array<i64: 8>, scalar_prefetch = 0 : i64, scratch_operands = 0 : i64, tpu.core_type = #tpu.core_type<tc>, window_params = [{transform_indices = @transform_0, window_bounds = array<i64: 512, 128>}, {pipeline_mode = #tpu.pipeline_mode<synchronous>, transform_indices = @transform_1, window_bounds = array<i64: 1, 128>}, {pipeline_mode = #tpu.pipeline_mode<synchronous>, transform_indices = @transform_2, window_bounds = array<i64: 1, 128>}, {transform_indices = @transform_3, window_bounds = array<i64: 512, 128>}]} {
    %c0 = arith.constant 0 : index
    %c0_0 = arith.constant 0 : index
    %0 = vector.load %arg1[%c0, %c0_0] : memref<512x128xf32, #tpu.memory_space<vmem>>, vector<512x128xf32>
    %c0_1 = arith.constant 0 : index
    %c0_2 = arith.constant 0 : index
    %1 = vector.load %arg2[%c0_1, %c0_2] : memref<1x128xf32, #tpu.memory_space<vmem>>, vector<1x128xf32>
    %2 = vector.broadcast %1 : vector<1x128xf32> to vector<512x128xf32>
    %3 = arith.mulf %0, %2 : vector<512x128xf32>
    %c0_3 = arith.constant 0 : index
    %c0_4 = arith.constant 0 : index
    %4 = vector.load %arg3[%c0_3, %c0_4] : memref<1x128xf32, #tpu.memory_space<vmem>>, vector<1x128xf32>
    %5 = vector.broadcast %4 : vector<1x128xf32> to vector<512x128xf32>
    %6 = arith.addf %3, %5 : vector<512x128xf32>
    %cst = arith.constant 0.000000e+00 : f32
    %7 = vector.broadcast %cst : f32 to vector<512x128xf32>
    %8 = arith.maximumf %6, %7 : vector<512x128xf32>
    %c0_5 = arith.constant 0 : index
    %c0_6 = arith.constant 0 : index
    %9 = vector.load %arg4[%c0_5, %c0_6] : memref<512x128xf32, #tpu.memory_space<vmem>>, vector<512x128xf32>
    tpu.vector_store %arg4[%c0_5, %c0_6], %8 {strides = array<i32>} : memref<512x128xf32, #tpu.memory_space<vmem>>, vector<512x128xf32>,
    return
  }
  func.func @transform_0(%arg0: i32) -> (i32, i32) {
    %c0_i32 = arith.constant 0 : i32
    %c0_i32_0 = arith.constant 0 : i32
    return %arg0, %c0_i32 : i32, i32
  }
  func.func @transform_1(%arg0: i32) -> (i32, i32) {
    %c0_i32 = arith.constant 0 : i32
    %c0_i32_0 = arith.constant 0 : i32
    %c0_i32_1 = arith.constant 0 : i32
    return %c0_i32, %c0_i32_0 : i32, i32
  }
  func.func @transform_2(%arg0: i32) -> (i32, i32) {
    %c0_i32 = arith.constant 0 : i32
    %c0_i32_0 = arith.constant 0 : i32
    %c0_i32_1 = arith.constant 0 : i32
    return %c0_i32, %c0_i32_0 : i32, i32
  }
  func.func @transform_3(%arg0: i32) -> (i32, i32) {
    %c0_i32 = arith.constant 0 : i32
    %c0_i32_0 = arith.constant 0 : i32
    return %arg0, %c0_i32 : i32, i32
  }
}

</mosaic_0001>

<llo_original>
// kernel: basic_conv3d.2
$region0: #{basic_conv3d.2}
  #allocation0 [shape = 'u32[]', space=smem, size = 0x4, offset = 0x4, fixed_abs, tag = 'smem constant byte address 0x4 - core index']
  #allocation1 [shape = 'u32[72,128]{1,0:T(1,128)}', space=vmem, size = 0x9000, scoped, tag = 'internal scratch']
  %s0 = inlined_call_operand.vmem [shape: bf16[4096,128], index: 0, kind: input, shape index: {}]
  %s1 = inlined_call_operand.vmem [shape: bf16[128,128], index: 1, kind: input, shape index: {}]
  %s2 = inlined_call_operand.vmem [shape: f32[4096,128], index: 2, kind: output, shape index: {0}]
  %s3 = inlined_call_operand.vmem [shape: f32[8,8,128], index: 3, kind: output, shape index: {1}]
  %4 = xla_tuple %s2, %s3
  %s5 = sld [smem:[#allocation0]]
  $region49: #{basic_conv3d.2} parent=0
    _
  %s7 = ssub.s32 1, %s5
  %s8 = scalar_select 0, %s7, %s5
  loop: start=0, step=1, limit=10
  $region2: #{basic_conv3d.2} parent=0 // loop_pre_header
    _
  $region3: #{basic_conv3d.2} parent=0 // loop_header
    %s10 = sphi 0, %s14
    %p11 = scmp.ge.s32.totalorder %s10, 10
    %s20 = sphi 0, %s22
    %s23 = sphi 0, %s20
    %s24 = sphi 0, %s23
    %s40 = sphi 0, %s24
    %s44 = sphi 0, %s44
    %s46 = sphi 0, %s44
    %s47 = sphi 0, %s46
    %s61 = sphi 0, %s47
    %s67 = sphi 0, %s69
    %s70 = sphi 0, %s67
    %s71 = sphi 0, %s70
    %s87 = sphi 0, %s71
    %s93 = sphi 0, %s95
    %s96 = sphi 0, %s93
    %s97 = sphi 0, %s96
    %s113 = sphi 0, %s97
  $region4: #{basic_conv3d.2} parent=0 // loop_header_branch
    %13 = sbr.rel (%p11) target = $region8
  $region5: #{basic_conv3d.2} parent=0 // loop_body
    %s15 = ssub.s32 %s10, 1
    %s16 = ssub.s32 %s10, 2
    %s17 = sadd.s32 %s10, 1
    %s18 = ssub.s32 %s10, %s17
    %p19 = scmp.eq.s32.totalorder %s18, 0
    %s21 = sadd.s32 %s20, 1
    %s22 = scalar_select %p19, %s20, %s21
    %p25 = pneg %p19
    %p26 = scmp.eq.s32.totalorder %s10, 7
    %p27 = por %p25, %p26
    %p28 = scmp.ne.s32.totalorder %s20, %s23
    %p29 = scmp.eq.s32.totalorder %s10, 0
    %p30 = por %p28, %p29
    %p31 = scmp.ne.s32.totalorder %s20, %s23
    %p32 = scmp.eq.s32.totalorder %s15, 7
    %p33 = por %p31, %p32
    %p34 = scmp.ne.s32.totalorder %s23, %s24
    %p35 = scmp.eq.s32.totalorder %s15, 0
    %p36 = por %p34, %p35
    %p37 = scmp.ne.s32.totalorder %s23, %s24
    %p38 = scmp.eq.s32.totalorder %s16, 7
    %p39 = por %p37, %p38
    %p41 = scmp.ne.s32.totalorder %s24, %s40
    %p42 = scmp.eq.s32.totalorder %s16, 0
    %p43 = por %p41, %p42
    %s45 = sadd.s32 %s44, 1
    %p48 = scmp.eq.s32.totalorder %s10, 7
    %p49 = scmp.ne.s32.totalorder %s44, %s46
    %p50 = scmp.eq.s32.totalorder %s10, 0
    %p51 = por %p49, %p50
    %p52 = scmp.ne.s32.totalorder %s44, %s46
    %p53 = scmp.eq.s32.totalorder %s15, 7
    %p54 = por %p52, %p53
    %p55 = scmp.ne.s32.totalorder %s46, %s47
    %p56 = scmp.eq.s32.totalorder %s15, 0
    %p57 = por %p55, %p56
    %p58 = scmp.ne.s32.totalorder %s46, %s47
    %p59 = scmp.eq.s32.totalorder %s16, 7
    %p60 = por %p58, %p59
    %p62 = scmp.ne.s32.totalorder %s47, %s61
    %p63 = scmp.eq.s32.totalorder %s16, 0
    %p64 = por %p62, %p63
    %s65 = ssub.s32 %s10, %s17
    %p66 = scmp.eq.s32.totalorder %s65, 0
    %s68 = sadd.s32 %s67, 1
    %s69 = scalar_select %p66, %s67, %s68
    %p72 = pneg %p66
    %p73 = scmp.eq.s32.totalorder %s10, 7
    %p74 = por %p72, %p73
    %p75 = scmp.ne.s32.totalorder %s67, %s70
    %p76 = scmp.eq.s32.totalorder %s10, 0
    %p77 = por %p75, %p76
    %p78 = scmp.ne.s32.totalorder %s67, %s70
    %p79 = scmp.eq.s32.totalorder %s15, 7
    %p80 = por %p78, %p79
    %p81 = scmp.ne.s32.totalorder %s70, %s71
    %p82 = scmp.eq.s32.totalorder %s15, 0
    %p83 = por %p81, %p82
    %p84 = scmp.ne.s32.totalorder %s70, %s71
    %p85 = scmp.eq.s32.totalorder %s16, 7
    %p86 = por %p84, %p85
    %p88 = scmp.ne.s32.totalorder %s71, %s87
    %p89 = scmp.eq.s32.totalorder %s16, 0
    %p90 = por %p88, %p89
    %s91 = ssub.s32 %s10, %s17
    %p92 = scmp.eq.s32.totalorder %s91, 0
    %s94 = sadd.s32 %s93, 1
    %s95 = scalar_select %p92, %s93, %s94
    %p98 = pneg %p92
    %p99 = scmp.eq.s32.totalorder %s10, 7
    %p100 = por %p98, %p99
    %p101 = scmp.ne.s32.totalorder %s93, %s96
    %p102 = scmp.eq.s32.totalorder %s10, 0
    %p103 = por %p101, %p102
    %p104 = scmp.ne.s32.totalorder %s93, %s96
    %p105 = scmp.eq.s32.totalorder %s15, 7
    %p106 = por %p104, %p105
    %p107 = scmp.ne.s32.totalorder %s96, %s97
    %p108 = scmp.eq.s32.totalorder %s15, 0
    %p109 = por %p107, %p108
    %p110 = scmp.ne.s32.totalorder %s96, %s97
    %p111 = scmp.eq.s32.totalorder %s16, 7
    %p112 = por %p110, %p111
    %p114 = scmp.ne.s32.totalorder %s97, %s113
    %p115 = scmp.eq.s32.totalorder %s16, 0
    %p116 = por %p114, %p115
    %p117 = scmp.le.s32.totalorder 1, %s10
    %p118 = scmp.lt.s32.totalorder %s10, 9
    %p119 = pnand %p117, %p118
    %p120 = pneg %p119
    // Predicated region
    $region9: #{basic_conv3d.2} parent=5 // pred_check
      _
    $region10: #{basic_conv3d.2} parent=5 // pred_check_branch
      %122 = sbr.rel (%p119) target = $region12
    $region11: #{basic_conv3d.2} parent=5 // pred_region
      %s123 = ssub.s32 %s10, 1
      // Predicated region
      $region13: #{basic_conv3d.2} parent=11 // pred_check
        %p124 = pneg %p57
      $region14: #{basic_conv3d.2} parent=11 // pred_check_branch
        %126 = sbr.rel (%p124) target = $region16
      $region15: #{basic_conv3d.2} parent=11 // pred_region
        _
      $region16: #{basic_conv3d.2} parent=11 // pred_fallthru
        _
    $region12: #{basic_conv3d.2} parent=5 // pred_fallthru
      _
    %p127 = scmp.lt.s32.totalorder %s10, 8
    // Predicated region
    $region17: #{basic_conv3d.2} parent=5 // pred_check
      %p128 = pneg %p127
    $region18: #{basic_conv3d.2} parent=5 // pred_check_branch
      %130 = sbr.rel (%p128) target = $region20
    $region19: #{basic_conv3d.2} parent=5 // pred_region
      // Predicated region
      $region21: #{basic_conv3d.2} parent=19 // pred_check
        %p131 = pneg %p30
      $region22: #{basic_conv3d.2} parent=19 // pred_check_branch
        %133 = sbr.rel (%p131) target = $region24
      $region23: #{basic_conv3d.2} parent=19 // pred_region
        %s134 = smul.u32 64, %s10
        %p135 = scmp.lt.s32.totalorder %s134, 511
        %s136 = scalar_select %p135, %s134, 511
        %s137 = smul.addr %s136, 4
        %s138 = scalar_lea.vmem %s0, %s137
        %s139 = smul.u32 64, %s10
      $region24: #{basic_conv3d.2} parent=19 // pred_fallthru
        _
    $region20: #{basic_conv3d.2} parent=5 // pred_fallthru
      _
    %p140 = scmp.le.s32.totalorder 1, %s10
    %p141 = scmp.lt.s32.totalorder %s10, 9
    %p142 = pnand %p140, %p141
    %p143 = pneg %p142
    // Predicated region
    $region25: #{basic_conv3d.2} parent=5 // pred_check
      _
    $region26: #{basic_conv3d.2} parent=5 // pred_check_branch
      %145 = sbr.rel (%p142) target = $region28
    $region27: #{basic_conv3d.2} parent=5 // pred_region
      %s146 = ssub.s32 %s10, 1
      %s147 = smul.u32 64, %s15
      %p148 = scmp.lt.s32.totalorder %s147, 511
      %s149 = scalar_select %p148, %s147, 511
      %s150 = smul.addr %s149, 4
      %s151 = scalar_lea.vmem %s0, %s150
      %p152 = pneg %p36
      %p153 = pneg %p33
      %p154 = pneg %p57
      %p155 = pneg %p54
      %p156 = pneg %p83
      %p157 = pneg %p80
      %s158 = smul.u32 64, %s15
      %p159 = scmp.lt.s32.totalorder %s158, 511
      %s160 = scalar_select %p159, %s158, 511
      %s161 = smul.addr %s160, 8
      %s162 = scalar_lea.vmem %s2, %s161
      %p163 = pneg %p109
      %p164 = pneg %p106
      %p165 = scmp.lt.s32.totalorder %s15, 7
      %s166 = scalar_select %p165, %s15, 7
      %s167 = smul.addr %s166, 8
      %s168 = scalar_lea.vmem %s3, %s167
      %s169 = smul.u32 64, %s15
      %p170 = scmp.lt.s32.totalorder %s169, 511
      %s171 = scalar_select %p170, %s169, 511
      %s172 = smul.addr %s171, 4
      %s173 = scalar_lea.vmem %s0, %s172
      %s174 = smul.u32 64, %s15
      %s175 = smul.u32 64, %s15
      %p176 = scmp.lt.s32.totalorder %s175, 511
      %s177 = scalar_select %p176, %s175, 511
      %s178 = smul.addr %s177, 8
      %s179 = scalar_lea.vmem %s2, %s178
      %s180 = smul.u32 64, %s15
      %p181 = scmp.lt.s32.totalorder %s15, 7
      %s182 = scalar_select %p181, %s15, 7
      %s183 = smul.addr %s182, 8
      %s184 = scalar_lea.vmem %s3, %s183
      %v185 = vld [vmem:[%s173] sm:$0xf]
      %v186 = vld [vmem:[%s173 + $0x4] sm:$0xf]
      %v187 = vld [vmem:[%s173 + $0x8] sm:$0xf]
      %v188 = vld [vmem:[%s173 + $0xc] sm:$0xf]
      %v189 = vld [vmem:[%s173 + $0x10] sm:$0xf]
      %v190 = vld [vmem:[%s173 + $0x14] sm:$0xf]
      %v191 = vld [vmem:[%s173 + $0x18] sm:$0xf]
      %v192 = vld [vmem:[%s173 + $0x1c] sm:$0xf]
      %v193 = vld [vmem:[%s173 + $0x20] sm:$0xf]
      %v194 = vld [vmem:[%s173 + $0x24] sm:$0xf]
      %v195 = vld [vmem:[%s173 + $0x28] sm:$0xf]
      %v196 = vld [vmem:[%s173 + $0x2c] sm:$0xf]
      %v197 = vld [vmem:[%s173 + $0x30] sm:$0xf]
      %v198 = vld [vmem:[%s173 + $0x34] sm:$0xf]
      %v199 = vld [vmem:[%s173 + $0x38] sm:$0xf]
      %v200 = vld [vmem:[%s173 + $0x3c] sm:$0xf]
      %v201 = vld [vmem:[%s173 + $0x40] sm:$0xf]
      %v202 = vld [vmem:[%s173 + $0x44] sm:$0xf]
      %v203 = vld [vmem:[%s173 + $0x48] sm:$0xf]
      %v204 = vld [vmem:[%s173 + $0x4c] sm:$0xf]
      %v205 = vld [vmem:[%s173 + $0x50] sm:$0xf]
      %v206 = vld [vmem:[%s173 + $0x54] sm:$0xf]
      %v207 = vld [vmem:[%s173 + $0x58] sm:$0xf]
      %v208 = vld [vmem:[%s173 + $0x5c] sm:$0xf]
      %v209 = vld [vmem:[%s173 + $0x60] sm:$0xf]
      %v210 = vld [vmem:[%s173 + $0x64] sm:$0xf]
      %v211 = vld [vmem:[%s173 + $0x68] sm:$0xf]
      %v212 = vld [vmem:[%s173 + $0x6c] sm:$0xf]
      %v213 = vld [vmem:[%s173 + $0x70] sm:$0xf]
      %v214 = vld [vmem:[%s173 + $0x74] sm:$0xf]
      %v215 = vld [vmem:[%s173 + $0x78] sm:$0xf]
      %v216 = vld [vmem:[%s173 + $0x7c] sm:$0xf]
      %v217 = vld [vmem:[%s173 + $0x80] sm:$0xf]
      %v218 = vld [vmem:[%s173 + $0x84] sm:$0xf]
      %v219 = vld [vmem:[%s173 + $0x88] sm:$0xf]
      %v220 = vld [vmem:[%s173 + $0x8c] sm:$0xf]
      %v221 = vld [vmem:[%s173 + $0x90] sm:$0xf]
      %v222 = vld [vmem:[%s173 + $0x94] sm:$0xf]
      %v223 = vld [vmem:[%s173 + $0x98] sm:$0xf]
      %v224 = vld [vmem:[%s173 + $0x9c] sm:$0xf]
      %v225 = vld [vmem:[%s173 + $0xa0] sm:$0xf]
      %v226 = vld [vmem:[%s173 + $0xa4] sm:$0xf]
      %v227 = vld [vmem:[%s173 + $0xa8] sm:$0xf]
      %v228 = vld [vmem:[%s173 + $0xac] sm:$0xf]
      %v229 = vld [vmem:[%s173 + $0xb0] sm:$0xf]
      %v230 = vld [vmem:[%s173 + $0xb4] sm:$0xf]
      %v231 = vld [vmem:[%s173 + $0xb8] sm:$0xf]
      %v232 = vld [vmem:[%s173 + $0xbc] sm:$0xf]
      %v233 = vld [vmem:[%s173 + $0xc0] sm:$0xf]
      %v234 = vld [vmem:[%s173 + $0xc4] sm:$0xf]
      %v235 = vld [vmem:[%s173 + $0xc8] sm:$0xf]
      %v236 = vld [vmem:[%s173 + $0xcc] sm:$0xf]
      %v237 = vld [vmem:[%s173 + $0xd0] sm:$0xf]
      %v238 = vld [vmem:[%s173 + $0xd4] sm:$0xf]
      %v239 = vld [vmem:[%s173 + $0xd8] sm:$0xf]
      %v240 = vld [vmem:[%s173 + $0xdc] sm:$0xf]
      %v241 = vld [vmem:[%s173 + $0xe0] sm:$0xf]
      %v242 = vld [vmem:[%s173 + $0xe4] sm:$0xf]
      %v243 = vld [vmem:[%s173 + $0xe8] sm:$0xf]
      %v244 = vld [vmem:[%s173 + $0xec] sm:$0xf]
      %v245 = vld [vmem:[%s173 + $0xf0] sm:$0xf]
      %v246 = vld [vmem:[%s173 + $0xf4] sm:$0xf]
      %v247 = vld [vmem:[%s173 + $0xf8] sm:$0xf]
      %v248 = vld [vmem:[%s173 + $0xfc] sm:$0xf]
      %v249 = vld [vmem:[%s1] sm:$0xf]
      %v250 = vld [vmem:[%s1 + $0x4] sm:$0xf]
      %v251 = vld [vmem:[%s1 + $0x8] sm:$0xf]
      %v252 = vld [vmem:[%s1 + $0xc] sm:$0xf]
      %v253 = vld [vmem:[%s1 + $0x10] sm:$0xf]
      %v254 = vld [vmem:[%s1 + $0x14] sm:$0xf]
      %v255 = vld [vmem:[%s1 + $0x18] sm:$0xf]
      %v256 = vld [vmem:[%s1 + $0x1c] sm:$0xf]
      %v257 = vld [vmem:[%s1 + $0x20] sm:$0xf]
      %v258 = vld [vmem:[%s1 + $0x24] sm:$0xf]
      %v259 = vld [vmem:[%s1 + $0x28] sm:$0xf]
      %v260 = vld [vmem:[%s1 + $0x2c] sm:$0xf]
      %v261 = vld [vmem:[%s1 + $0x30] sm:$0xf]
      %v262 = vld [vmem:[%s1 + $0x34] sm:$0xf]
      %v263 = vld [vmem:[%s1 + $0x38] sm:$0xf]
      %v264 = vld [vmem:[%s1 + $0x3c] sm:$0xf]
      %v329 = vunpack.c.l.b16 %v185
      %v330 = vunpack.c.l.b16 %v186
      %v331 = vunpack.c.l.b16 %v187
      %v332 = vunpack.c.l.b16 %v188
      %v333 = vunpack.c.l.b16 %v189
      %v334 = vunpack.c.l.b16 %v190
      %v335 = vunpack.c.l.b16 %v191
      %v336 = vunpack.c.l.b16 %v192
      %v337 = vunpack.c.l.b16 %v193
      %v338 = vunpack.c.l.b16 %v194
      %v339 = vunpack.c.l.b16 %v195
      %v340 = vunpack.c.l.b16 %v196
      %v341 = vunpack.c.l.b16 %v197
      %v342 = vunpack.c.l.b16 %v198
      %v343 = vunpack.c.l.b16 %v199
      %v344 = vunpack.c.l.b16 %v200
      %v345 = vunpack.c.l.b16 %v201
      %v346 = vunpack.c.l.b16 %v202
      %v347 = vunpack.c.l.b16 %v203
      %v348 = vunpack.c.l.b16 %v204
      %v349 = vunpack.c.l.b16 %v205
      %v350 = vunpack.c.l.b16 %v206
      %v351 = vunpack.c.l.b16 %v207
      %v352 = vunpack.c.l.b16 %v208
      %v353 = vunpack.c.l.b16 %v209
      %v354 = vunpack.c.l.b16 %v210
      %v355 = vunpack.c.l.b16 %v211
      %v356 = vunpack.c.l.b16 %v212
      %v357 = vunpack.c.l.b16 %v213
      %v358 = vunpack.c.l.b16 %v214
      %v359 = vunpack.c.l.b16 %v215
      %v360 = vunpack.c.l.b16 %v216
      %v361 = vunpack.c.l.b16 %v217
      %v362 = vunpack.c.l.b16 %v218
      %v363 = vunpack.c.l.b16 %v219
      %v364 = vunpack.c.l.b16 %v220
      %v365 = vunpack.c.l.b16 %v221
      %v366 = vunpack.c.l.b16 %v222
      %v367 = vunpack.c.l.b16 %v223
      %v368 = vunpack.c.l.b16 %v224
      %v369 = vunpack.c.l.b16 %v225
      %v370 = vunpack.c.l.b16 %v226
      %v371 = vunpack.c.l.b16 %v227
      %v372 = vunpack.c.l.b16 %v228
      %v373 = vunpack.c.l.b16 %v229
      %v374 = vunpack.c.l.b16 %v230
      %v375 = vunpack.c.l.b16 %v231
      %v376 = vunpack.c.l.b16 %v232
      %v377 = vunpack.c.l.b16 %v233
      %v378 = vunpack.c.l.b16 %v234
      %v379 = vunpack.c.l.b16 %v235
      %v380 = vunpack.c.l.b16 %v236
      %v381 = vunpack.c.l.b16 %v237
      %v382 = vunpack.c.l.b16 %v238
      %v383 = vunpack.c.l.b16 %v239
      %v384 = vunpack.c.l.b16 %v240
      %v385 = vunpack.c.l.b16 %v241
      %v386 = vunpack.c.l.b16 %v242
      %v387 = vunpack.c.l.b16 %v243
      %v388 = vunpack.c.l.b16 %v244
      %v389 = vunpack.c.l.b16 %v245
      %v390 = vunpack.c.l.b16 %v246
      %v391 = vunpack.c.l.b16 %v247
      %v392 = vunpack.c.l.b16 %v248
      %v393 = vpack.c.b16 %v330, %v329
      %v394 = vpack.c.b16 %v332, %v331
      %v395 = vpack.c.b16 %v334, %v333
      %v396 = vpack.c.b16 %v336, %v335
      %v397 = vpack.c.b16 %v338, %v337
      %v398 = vpack.c.b16 %v340, %v339
      %v399 = vpack.c.b16 %v342, %v341
      %v400 = vpack.c.b16 %v344, %v343
      %v401 = vpack.c.b16 %v346, %v345
      %v402 = vpack.c.b16 %v348, %v347
      %v403 = vpack.c.b16 %v350, %v349
      %v404 = vpack.c.b16 %v352, %v351
      %v405 = vpack.c.b16 %v354, %v353
      %v406 = vpack.c.b16 %v356, %v355
      %v407 = vpack.c.b16 %v358, %v357
      %v408 = vpack.c.b16 %v360, %v359
      %v409 = vpack.c.b16 %v362, %v361
      %v410 = vpack.c.b16 %v364, %v363
      %v411 = vpack.c.b16 %v366, %v365
      %v412 = vpack.c.b16 %v368, %v367
      %v413 = vpack.c.b16 %v370, %v369
      %v414 = vpack.c.b16 %v372, %v371
      %v415 = vpack.c.b16 %v374, %v373
      %v416 = vpack.c.b16 %v376, %v375
      %v417 = vpack.c.b16 %v378, %v377
      %v418 = vpack.c.b16 %v380, %v379
      %v419 = vpack.c.b16 %v382, %v381
      %v420 = vpack.c.b16 %v384, %v383
      %v421 = vpack.c.b16 %v386, %v385
      %v422 = vpack.c.b16 %v388, %v387
      %v423 = vpack.c.b16 %v390, %v389
      %v424 = vpack.c.b16 %v392, %v391
      %v473 = vunpack.c.l.b16 %v249
      %v474 = vunpack.c.l.b16 %v250
      %v475 = vunpack.c.l.b16 %v251
      %v476 = vunpack.c.l.b16 %v252
      %v477 = vunpack.c.l.b16 %v253
      %v478 = vunpack.c.l.b16 %v254
      %v479 = vunpack.c.l.b16 %v255
      %v480 = vunpack.c.l.b16 %v256
      %v481 = vunpack.c.l.b16 %v257
      %v482 = vunpack.c.l.b16 %v258
      %v483 = vunpack.c.l.b16 %v259
      %v484 = vunpack.c.l.b16 %v260
      %v485 = vunpack.c.l.b16 %v261
      %v486 = vunpack.c.l.b16 %v262
      %v487 = vunpack.c.l.b16 %v263
      %v488 = vunpack.c.l.b16 %v264
      %v489 = vpack.c.b16 %v474, %v473
      %v490 = vpack.c.b16 %v476, %v475
      %v491 = vpack.c.b16 %v478, %v477
      %v492 = vpack.c.b16 %v480, %v479
      %v493 = vpack.c.b16 %v482, %v481
      %v494 = vpack.c.b16 %v484, %v483
      %v495 = vpack.c.b16 %v486, %v485
      %v496 = vpack.c.b16 %v488, %v487
      %505 = vmatpush.bf16.msra.mxu0 %v496
      %506 = vmatpush.bf16.msra.mxu0 %v495
      %507 = vmatpush.bf16.msra.mxu0 %v494
      %508 = vmatpush.bf16.msra.mxu0 %v493
      %509 = vmatpush.bf16.msra.mxu0 %v492
      %510 = vmatpush.bf16.msra.mxu0 %v491
      %511 = vmatpush.bf16.msra.mxu0 %v490
      %512 = vmatpush.bf16.msra.mxu0 %v489
      %513 = vmatmul.bf16.gmra.mxu0 %v393
      %v514 = vpop.f32.mrf.mxu0
      %v515 = vadd.f32 0.0, %v514
      %v516 = vpop.f32.mrf.mxu0
      %v517 = vadd.f32 0.0, %v516
      %518 = vmatmul.bf16.gmra.mxu0 %v394
      %v519 = vpop.f32.mrf.mxu0
      %v520 = vadd.f32 0.0, %v519
      %v521 = vpop.f32.mrf.mxu0
      %v522 = vadd.f32 0.0, %v521
      %523 = vmatmul.bf16.gmra.mxu0 %v395
      %v524 = vpop.f32.mrf.mxu0
      %v525 = vadd.f32 0.0, %v524
      %v526 = vpop.f32.mrf.mxu0
      %v527 = vadd.f32 0.0, %v526
      %528 = vmatmul.bf16.gmra.mxu0 %v396
      %v529 = vpop.f32.mrf.mxu0
      %v530 = vadd.f32 0.0, %v529
      %v531 = vpop.f32.mrf.mxu0
      %v532 = vadd.f32 0.0, %v531
      %533 = vmatmul.bf16.gmra.mxu0 %v397
      %v534 = vpop.f32.mrf.mxu0
      %v535 = vadd.f32 0.0, %v534
      %v536 = vpop.f32.mrf.mxu0
      %v537 = vadd.f32 0.0, %v536
      %538 = vmatmul.bf16.gmra.mxu0 %v398
      %v539 = vpop.f32.mrf.mxu0
      %v540 = vadd.f32 0.0, %v539
      %v541 = vpop.f32.mrf.mxu0
      %v542 = vadd.f32 0.0, %v541
      %543 = vmatmul.bf16.gmra.mxu0 %v399
      %v544 = vpop.f32.mrf.mxu0
      %v545 = vadd.f32 0.0, %v544
      %v546 = vpop.f32.mrf.mxu0
      %v547 = vadd.f32 0.0, %v546
      %548 = vmatmul.bf16.gmra.mxu0 %v400
      %v549 = vpop.f32.mrf.mxu0
      %v550 = vadd.f32 0.0, %v549
      %v551 = vpop.f32.mrf.mxu0
      %v552 = vadd.f32 0.0, %v551
      %553 = vmatmul.bf16.gmra.mxu0 %v401
      %v554 = vpop.f32.mrf.mxu0
      %v555 = vadd.f32 0.0, %v554
      %v556 = vpop.f32.mrf.mxu0
      %v557 = vadd.f32 0.0, %v556
      %558 = vmatmul.bf16.gmra.mxu0 %v402
      %v559 = vpop.f32.mrf.mxu0
      %v560 = vadd.f32 0.0, %v559
      %v561 = vpop.f32.mrf.mxu0
      %v562 = vadd.f32 0.0, %v561
      %563 = vmatmul.bf16.gmra.mxu0 %v403
      %v564 = vpop.f32.mrf.mxu0
      %v565 = vadd.f32 0.0, %v564
      %v566 = vpop.f32.mrf.mxu0
      %v567 = vadd.f32 0.0, %v566
      %568 = vmatmul.bf16.gmra.mxu0 %v404
      %v569 = vpop.f32.mrf.mxu0
      %v570 = vadd.f32 0.0, %v569
      %v571 = vpop.f32.mrf.mxu0
      %v572 = vadd.f32 0.0, %v571
      %573 = vmatmul.bf16.gmra.mxu0 %v405
      %v574 = vpop.f32.mrf.mxu0
      %v575 = vadd.f32 0.0, %v574
      %v576 = vpop.f32.mrf.mxu0
      %v577 = vadd.f32 0.0, %v576
      %578 = vmatmul.bf16.gmra.mxu0 %v406
      %v579 = vpop.f32.mrf.mxu0
      %v580 = vadd.f32 0.0, %v579
      %v581 = vpop.f32.mrf.mxu0
      %v582 = vadd.f32 0.0, %v581
      %583 = vmatmul.bf16.gmra.mxu0 %v407
      %v584 = vpop.f32.mrf.mxu0
      %v585 = vadd.f32 0.0, %v584
      %v586 = vpop.f32.mrf.mxu0
      %v587 = vadd.f32 0.0, %v586
      %588 = vmatmul.bf16.gmra.mxu0 %v408
      %v589 = vpop.f32.mrf.mxu0
      %v590 = vadd.f32 0.0, %v589
      %v591 = vpop.f32.mrf.mxu0
      %v592 = vadd.f32 0.0, %v591
      %593 = vmatmul.bf16.gmra.mxu0 %v409
      %v594 = vpop.f32.mrf.mxu0
      %v595 = vadd.f32 0.0, %v594
      %v596 = vpop.f32.mrf.mxu0
      %v597 = vadd.f32 0.0, %v596
      %598 = vmatmul.bf16.gmra.mxu0 %v410
      %v599 = vpop.f32.mrf.mxu0
      %v600 = vadd.f32 0.0, %v599
      %v601 = vpop.f32.mrf.mxu0
      %v602 = vadd.f32 0.0, %v601
      %603 = vmatmul.bf16.gmra.mxu0 %v411
      %v604 = vpop.f32.mrf.mxu0
      %v605 = vadd.f32 0.0, %v604
      %v606 = vpop.f32.mrf.mxu0
      %v607 = vadd.f32 0.0, %v606
      %608 = vmatmul.bf16.gmra.mxu0 %v412
      %v609 = vpop.f32.mrf.mxu0
      %v610 = vadd.f32 0.0, %v609
      %v611 = vpop.f32.mrf.mxu0
      %v612 = vadd.f32 0.0, %v611
      %613 = vmatmul.bf16.gmra.mxu0 %v413
      %v614 = vpop.f32.mrf.mxu0
      %v615 = vadd.f32 0.0, %v614
      %v616 = vpop.f32.mrf.mxu0
      %v617 = vadd.f32 0.0, %v616
      %618 = vmatmul.bf16.gmra.mxu0 %v414
      %v619 = vpop.f32.mrf.mxu0
      %v620 = vadd.f32 0.0, %v619
      %v621 = vpop.f32.mrf.mxu0
      %v622 = vadd.f32 0.0, %v621
      %623 = vmatmul.bf16.gmra.mxu0 %v415
      %v624 = vpop.f32.mrf.mxu0
      %v625 = vadd.f32 0.0, %v624
      %v626 = vpop.f32.mrf.mxu0
      %v627 = vadd.f32 0.0, %v626
      %628 = vmatmul.bf16.gmra.mxu0 %v416
      %v629 = vpop.f32.mrf.mxu0
      %v630 = vadd.f32 0.0, %v629
      %v631 = vpop.f32.mrf.mxu0
      %v632 = vadd.f32 0.0, %v631
      %633 = vmatmul.bf16.gmra.mxu0 %v417
      %v634 = vpop.f32.mrf.mxu0
      %v635 = vadd.f32 0.0, %v634
      %v636 = vpop.f32.mrf.mxu0
      %v637 = vadd.f32 0.0, %v636
      %638 = vmatmul.bf16.gmra.mxu0 %v418
      %v639 = vpop.f32.mrf.mxu0
      %v640 = vadd.f32 0.0, %v639
      %v641 = vpop.f32.mrf.mxu0
      %v642 = vadd.f32 0.0, %v641
      %643 = vmatmul.bf16.gmra.mxu0 %v419
      %v644 = vpop.f32.mrf.mxu0
      %v645 = vadd.f32 0.0, %v644
      %v646 = vpop.f32.mrf.mxu0
      %v647 = vadd.f32 0.0, %v646
      %648 = vmatmul.bf16.gmra.mxu0 %v420
      %v649 = vpop.f32.mrf.mxu0
      %v650 = vadd.f32 0.0, %v649
      %v651 = vpop.f32.mrf.mxu0
      %v652 = vadd.f32 0.0, %v651
      %653 = vmatmul.bf16.gmra.mxu0 %v421
      %v654 = vpop.f32.mrf.mxu0
      %v655 = vadd.f32 0.0, %v654
      %v656 = vpop.f32.mrf.mxu0
      %v657 = vadd.f32 0.0, %v656
      %658 = vmatmul.bf16.gmra.mxu0 %v422
      %v659 = vpop.f32.mrf.mxu0
      %v660 = vadd.f32 0.0, %v659
      %v661 = vpop.f32.mrf.mxu0
      %v662 = vadd.f32 0.0, %v661
      %663 = vmatmul.bf16.gmra.mxu0 %v423
      %v664 = vpop.f32.mrf.mxu0
      %v665 = vadd.f32 0.0, %v664
      %v666 = vpop.f32.mrf.mxu0
      %v667 = vadd.f32 0.0, %v666
      %668 = vmatmul.bf16.gmra.mxu0 %v424
      %v669 = vpop.f32.mrf.mxu0
      %v670 = vadd.f32 0.0, %v669
      %v671 = vpop.f32.mrf.mxu0
      %v672 = vadd.f32 0.0, %v671
      %673 = vdwg.mxu0
      %674 = vst [vmem:[%s179] sm:$0xff] %v515
      %675 = vst [vmem:[%s179 + $0x8] sm:$0xff] %v517
      %676 = vst [vmem:[%s179 + $0x10] sm:$0xff] %v520
      %677 = vst [vmem:[%s179 + $0x18] sm:$0xff] %v522
      %678 = vst [vmem:[%s179 + $0x20] sm:$0xff] %v525
      %679 = vst [vmem:[%s179 + $0x28] sm:$0xff] %v527
      %680 = vst [vmem:[%s179 + $0x30] sm:$0xff] %v530
      %681 = vst [vmem:[%s179 + $0x38] sm:$0xff] %v532
      %682 = vst [vmem:[%s179 + $0x40] sm:$0xff] %v535
      %683 = vst [vmem:[%s179 + $0x48] sm:$0xff] %v537
      %684 = vst [vmem:[%s179 + $0x50] sm:$0xff] %v540
      %685 = vst [vmem:[%s179 + $0x58] sm:$0xff] %v542
      %686 = vst [vmem:[%s179 + $0x60] sm:$0xff] %v545
      %687 = vst [vmem:[%s179 + $0x68] sm:$0xff] %v547
      %688 = vst [vmem:[%s179 + $0x70] sm:$0xff] %v550
      %689 = vst [vmem:[%s179 + $0x78] sm:$0xff] %v552
      %690 = vst [vmem:[%s179 + $0x80] sm:$0xff] %v555
      %691 = vst [vmem:[%s179 + $0x88] sm:$0xff] %v557
      %692 = vst [vmem:[%s179 + $0x90] sm:$0xff] %v560
      %693 = vst [vmem:[%s179 + $0x98] sm:$0xff] %v562
      %694 = vst [vmem:[%s179 + $0xa0] sm:$0xff] %v565
      %695 = vst [vmem:[%s179 + $0xa8] sm:$0xff] %v567
      %696 = vst [vmem:[%s179 + $0xb0] sm:$0xff] %v570
      %697 = vst [vmem:[%s179 + $0xb8] sm:$0xff] %v572
      %698 = vst [vmem:[%s179 + $0xc0] sm:$0xff] %v575
      %699 = vst [vmem:[%s179 + $0xc8] sm:$0xff] %v577
      %700 = vst [vmem:[%s179 + $0xd0] sm:$0xff] %v580
      %701 = vst [vmem:[%s179 + $0xd8] sm:$0xff] %v582
      %702 = vst [vmem:[%s179 + $0xe0] sm:$0xff] %v585
      %703 = vst [vmem:[%s179 + $0xe8] sm:$0xff] %v587
      %704 = vst [vmem:[%s179 + $0xf0] sm:$0xff] %v590
      %705 = vst [vmem:[%s179 + $0xf8] sm:$0xff] %v592
      %706 = vst [vmem:[%s179 + $0x100] sm:$0xff] %v595
      %707 = vst [vmem:[%s179 + $0x108] sm:$0xff] %v597
      %708 = vst [vmem:[%s179 + $0x110] sm:$0xff] %v600
      %709 = vst [vmem:[%s179 + $0x118] sm:$0xff] %v602
      %710 = vst [vmem:[%s179 + $0x120] sm:$0xff] %v605
      %711 = vst [vmem:[%s179 + $0x128] sm:$0xff] %v607
      %712 = vst [vmem:[%s179 + $0x130] sm:$0xff] %v610
      %713 = vst [vmem:[%s179 + $0x138] sm:$0xff] %v612
      %714 = vst [vmem:[%s179 + $0x140] sm:$0xff] %v615
      %715 = vst [vmem:[%s179 + $0x148] sm:$0xff] %v617
      %716 = vst [vmem:[%s179 + $0x150] sm:$0xff] %v620
      %717 = vst [vmem:[%s179 + $0x158] sm:$0xff] %v622
      %718 = vst [vmem:[%s179 + $0x160] sm:$0xff] %v625
      %719 = vst [vmem:[%s179 + $0x168] sm:$0xff] %v627
      %720 = vst [vmem:[%s179 + $0x170] sm:$0xff] %v630
      %721 = vst [vmem:[%s179 + $0x178] sm:$0xff] %v632
      %722 = vst [vmem:[%s179 + $0x180] sm:$0xff] %v635
      %723 = vst [vmem:[%s179 + $0x188] sm:$0xff] %v637
      %724 = vst [vmem:[%s179 + $0x190] sm:$0xff] %v640
      %725 = vst [vmem:[%s179 + $0x198] sm:$0xff] %v642
      %726 = vst [vmem:[%s179 + $0x1a0] sm:$0xff] %v645
      %727 = vst [vmem:[%s179 + $0x1a8] sm:$0xff] %v647
      %728 = vst [vmem:[%s179 + $0x1b0] sm:$0xff] %v650
      %729 = vst [vmem:[%s179 + $0x1b8] sm:$0xff] %v652
      %730 = vst [vmem:[%s179 + $0x1c0] sm:$0xff] %v655
      %731 = vst [vmem:[%s179 + $0x1c8] sm:$0xff] %v657
      %732 = vst [vmem:[%s179 + $0x1d0] sm:$0xff] %v660
      %733 = vst [vmem:[%s179 + $0x1d8] sm:$0xff] %v662
      %734 = vst [vmem:[%s179 + $0x1e0] sm:$0xff] %v665
      %735 = vst [vmem:[%s179 + $0x1e8] sm:$0xff] %v667
      %736 = vst [vmem:[%s179 + $0x1f0] sm:$0xff] %v670
      %737 = vst [vmem:[%s179 + $0x1f8] sm:$0xff] %v672
      %v738 = vadd.f32 %v515, %v517
      %v739 = vadd.f32 %v738, %v520
      %v740 = vadd.f32 %v739, %v522
      %v741 = vadd.f32 %v740, %v525
      %v742 = vadd.f32 %v741, %v527
      %v743 = vadd.f32 %v742, %v530
      %v744 = vadd.f32 %v743, %v532
      %v745 = vadd.f32 %v744, %v535
      %v746 = vadd.f32 %v745, %v537
      %v747 = vadd.f32 %v746, %v540
      %v748 = vadd.f32 %v747, %v542
      %v749 = vadd.f32 %v748, %v545
      %v750 = vadd.f32 %v749, %v547
      %v751 = vadd.f32 %v750, %v550
      %v752 = vadd.f32 %v751, %v552
      %v753 = vadd.f32 %v752, %v555
      %v754 = vadd.f32 %v753, %v557
      %v755 = vadd.f32 %v754, %v560
      %v756 = vadd.f32 %v755, %v562
      %v757 = vadd.f32 %v756, %v565
      %v758 = vadd.f32 %v757, %v567
      %v759 = vadd.f32 %v758, %v570
      %v760 = vadd.f32 %v759, %v572
      %v761 = vadd.f32 %v760, %v575
      %v762 = vadd.f32 %v761, %v577
      %v763 = vadd.f32 %v762, %v580
      %v764 = vadd.f32 %v763, %v582
      %v765 = vadd.f32 %v764, %v585
      %v766 = vadd.f32 %v765, %v587
      %v767 = vadd.f32 %v766, %v590
      %v768 = vadd.f32 %v767, %v592
      %v769 = vadd.f32 %v768, %v595
      %v770 = vadd.f32 %v769, %v597
      %v771 = vadd.f32 %v770, %v600
      %v772 = vadd.f32 %v771, %v602
      %v773 = vadd.f32 %v772, %v605
      %v774 = vadd.f32 %v773, %v607
      %v775 = vadd.f32 %v774, %v610
      %v776 = vadd.f32 %v775, %v612
      %v777 = vadd.f32 %v776, %v615
      %v778 = vadd.f32 %v777, %v617
      %v779 = vadd.f32 %v778, %v620
      %v780 = vadd.f32 %v779, %v622
      %v781 = vadd.f32 %v780, %v625
      %v782 = vadd.f32 %v781, %v627
      %v783 = vadd.f32 %v782, %v630
      %v784 = vadd.f32 %v783, %v632
      %v785 = vadd.f32 %v784, %v635
      %v786 = vadd.f32 %v785, %v637
      %v787 = vadd.f32 %v786, %v640
      %v788 = vadd.f32 %v787, %v642
      %v789 = vadd.f32 %v788, %v645
      %v790 = vadd.f32 %v789, %v647
      %v791 = vadd.f32 %v790, %v650
      %v792 = vadd.f32 %v791, %v652
      %v793 = vadd.f32 %v792, %v655
      %v794 = vadd.f32 %v793, %v657
      %v795 = vadd.f32 %v794, %v660
      %v796 = vadd.f32 %v795, %v662
      %v797 = vadd.f32 %v796, %v665
      %v798 = vadd.f32 %v797, %v667
      %v799 = vadd.f32 %v798, %v670
      %v800 = vadd.f32 %v799, %v672
      %v801 = vrot.slane %v800, 4
      %v802 = vadd.f32 %v800, %v801
      %v803 = vrot.slane %v802, 2
      %v804 = vadd.f32 %v802, %v803
      %v805 = vrot.slane %v804, 1
      %v806 = vadd.f32 %v804, %v805
      %v807 = vmul.f32 %v515, %v515
      %v808 = vmul.f32 %v517, %v517
      %v809 = vmul.f32 %v520, %v520
      %v810 = vmul.f32 %v522, %v522
      %v811 = vmul.f32 %v525, %v525
      %v812 = vmul.f32 %v527, %v527
      %v813 = vmul.f32 %v530, %v530
      %v814 = vmul.f32 %v532, %v532
      %v815 = vmul.f32 %v535, %v535
      %v816 = vmul.f32 %v537, %v537
      %v817 = vmul.f32 %v540, %v540
      %v818 = vmul.f32 %v542, %v542
      %v819 = vmul.f32 %v545, %v545
      %v820 = vmul.f32 %v547, %v547
      %v821 = vmul.f32 %v550, %v550
      %v822 = vmul.f32 %v552, %v552
      %v823 = vmul.f32 %v555, %v555
      %v824 = vmul.f32 %v557, %v557
      %v825 = vmul.f32 %v560, %v560
      %v826 = vmul.f32 %v562, %v562
      %v827 = vmul.f32 %v565, %v565
      %v828 = vmul.f32 %v567, %v567
      %v829 = vmul.f32 %v570, %v570
      %v830 = vmul.f32 %v572, %v572
      %v831 = vmul.f32 %v575, %v575
      %v832 = vmul.f32 %v577, %v577
      %v833 = vmul.f32 %v580, %v580
      %v834 = vmul.f32 %v582, %v582
      %v835 = vmul.f32 %v585, %v585
      %v836 = vmul.f32 %v587, %v587
      %v837 = vmul.f32 %v590, %v590
      %v838 = vmul.f32 %v592, %v592
      %v839 = vmul.f32 %v595, %v595
      %v840 = vmul.f32 %v597, %v597
      %v841 = vmul.f32 %v600, %v600
      %v842 = vmul.f32 %v602, %v602
      %v843 = vmul.f32 %v605, %v605
      %v844 = vmul.f32 %v607, %v607
      %v845 = vmul.f32 %v610, %v610
      %v846 = vmul.f32 %v612, %v612
      %v847 = vmul.f32 %v615, %v615
      %v848 = vmul.f32 %v617, %v617
      %v849 = vmul.f32 %v620, %v620
      %v850 = vmul.f32 %v622, %v622
      %v851 = vmul.f32 %v625, %v625
      %v852 = vmul.f32 %v627, %v627
      %v853 = vmul.f32 %v630, %v630
      %v854 = vmul.f32 %v632, %v632
      %v855 = vmul.f32 %v635, %v635
      %v856 = vmul.f32 %v637, %v637
      %v857 = vmul.f32 %v640, %v640
      %v858 = vmul.f32 %v642, %v642
      %v859 = vmul.f32 %v645, %v645
      %v860 = vmul.f32 %v647, %v647
      %v861 = vmul.f32 %v650, %v650
      %v862 = vmul.f32 %v652, %v652
      %v863 = vmul.f32 %v655, %v655
      %v864 = vmul.f32 %v657, %v657
      %v865 = vmul.f32 %v660, %v660
      %v866 = vmul.f32 %v662, %v662
      %v867 = vmul.f32 %v665, %v665
      %v868 = vmul.f32 %v667, %v667
      %v869 = vmul.f32 %v670, %v670
      %v870 = vmul.f32 %v672, %v672
      %v871 = vadd.f32 %v807, %v808
      %v872 = vadd.f32 %v871, %v809
      %v873 = vadd.f32 %v872, %v810
      %v874 = vadd.f32 %v873, %v811
      %v875 = vadd.f32 %v874, %v812
      %v876 = vadd.f32 %v875, %v813
      %v877 = vadd.f32 %v876, %v814
      %v878 = vadd.f32 %v877, %v815
      %v879 = vadd.f32 %v878, %v816
      %v880 = vadd.f32 %v879, %v817
      %v881 = vadd.f32 %v880, %v818
      %v882 = vadd.f32 %v881, %v819
      %v883 = vadd.f32 %v882, %v820
      %v884 = vadd.f32 %v883, %v821
      %v885 = vadd.f32 %v884, %v822
      %v886 = vadd.f32 %v885, %v823
      %v887 = vadd.f32 %v886, %v824
      %v888 = vadd.f32 %v887, %v825
      %v889 = vadd.f32 %v888, %v826
      %v890 = vadd.f32 %v889, %v827
      %v891 = vadd.f32 %v890, %v828
      %v892 = vadd.f32 %v891, %v829
      %v893 = vadd.f32 %v892, %v830
      %v894 = vadd.f32 %v893, %v831
      %v895 = vadd.f32 %v894, %v832
      %v896 = vadd.f32 %v895, %v833
      %v897 = vadd.f32 %v896, %v834
      %v898 = vadd.f32 %v897, %v835
      %v899 = vadd.f32 %v898, %v836
      %v900 = vadd.f32 %v899, %v837
      %v901 = vadd.f32 %v900, %v838
      %v902 = vadd.f32 %v901, %v839
      %v903 = vadd.f32 %v902, %v840
      %v904 = vadd.f32 %v903, %v841
      %v905 = vadd.f32 %v904, %v842
      %v906 = vadd.f32 %v905, %v843
      %v907 = vadd.f32 %v906, %v844
      %v908 = vadd.f32 %v907, %v845
      %v909 = vadd.f32 %v908, %v846
      %v910 = vadd.f32 %v909, %v847
      %v911 = vadd.f32 %v910, %v848
      %v912 = vadd.f32 %v911, %v849
      %v913 = vadd.f32 %v912, %v850
      %v914 = vadd.f32 %v913, %v851
      %v915 = vadd.f32 %v914, %v852
      %v916 = vadd.f32 %v915, %v853
      %v917 = vadd.f32 %v916, %v854
      %v918 = vadd.f32 %v917, %v855
      %v919 = vadd.f32 %v918, %v856
      %v920 = vadd.f32 %v919, %v857
      %v921 = vadd.f32 %v920, %v858
      %v922 = vadd.f32 %v921, %v859
      %v923 = vadd.f32 %v922, %v860
      %v924 = vadd.f32 %v923, %v861
      %v925 = vadd.f32 %v924, %v862
      %v926 = vadd.f32 %v925, %v863
      %v927 = vadd.f32 %v926, %v864
      %v928 = vadd.f32 %v927, %v865
      %v929 = vadd.f32 %v928, %v866
      %v930 = vadd.f32 %v929, %v867
      %v931 = vadd.f32 %v930, %v868
      %v932 = vadd.f32 %v931, %v869
      %v933 = vadd.f32 %v932, %v870
      %v934 = vrot.slane %v933, 4
      %v935 = vadd.f32 %v933, %v934
      %v936 = vrot.slane %v935, 2
      %v937 = vadd.f32 %v935, %v936
      %v938 = vrot.slane %v937, 1
      %v939 = vadd.f32 %v937, %v938
      %vm940 = vcmask 1040384
      %v941 = vsel %vm940, %v806, %v939
      %vm942 = vcmask 1041408
      %v943 = vsel %vm942, %v941, 0.0
      %944 = vst [vmem:[%s184] sm:$0xff] %v943
      %s945 = smul.u32 64, %s15
      %p946 = scmp.lt.s32.totalorder %s945, 511
      %s947 = scalar_select %p946, %s945, 511
      %s948 = smul.addr %s947, 8
      %s949 = scalar_lea.vmem %s2, %s948
      %p950 = scmp.lt.s32.totalorder %s15, 7
      %s951 = scalar_select %p950, %s15, 7
      %s952 = smul.addr %s951, 8
      %s953 = scalar_lea.vmem %s3, %s952
      // Predicated region
      $region29: #{basic_conv3d.2} parent=27 // pred_check
        %p954 = pneg %p80
      $region30: #{basic_conv3d.2} parent=27 // pred_check_branch
        %956 = sbr.rel (%p954) target = $region32
      $region31: #{basic_conv3d.2} parent=27 // pred_region
        %s957 = smul.u32 64, %s15
      $region32: #{basic_conv3d.2} parent=27 // pred_fallthru
        _
      // Predicated region
      $region33: #{basic_conv3d.2} parent=27 // pred_check
        %p958 = pneg %p106
      $region34: #{basic_conv3d.2} parent=27 // pred_check_branch
        %960 = sbr.rel (%p958) target = $region36
      $region35: #{basic_conv3d.2} parent=27 // pred_region
        _
      $region36: #{basic_conv3d.2} parent=27 // pred_fallthru
        _
    $region28: #{basic_conv3d.2} parent=5 // pred_fallthru
      _
    %p961 = scmp.le.s32.totalorder 2, %s10
    // Predicated region
    $region37: #{basic_conv3d.2} parent=5 // pred_check
      %p962 = pneg %p961
    $region38: #{basic_conv3d.2} parent=5 // pred_check_branch
      %964 = sbr.rel (%p962) target = $region40
    $region39: #{basic_conv3d.2} parent=5 // pred_region
      %s965 = ssub.s32 %s10, 2
      // Predicated region
      $region41: #{basic_conv3d.2} parent=39 // pred_check
        %p966 = pneg %p86
      $region42: #{basic_conv3d.2} parent=39 // pred_check_branch
        %968 = sbr.rel (%p966) target = $region44
      $region43: #{basic_conv3d.2} parent=39 // pred_region
        %s969 = smul.u32 64, %s16
        %p970 = scmp.lt.s32.totalorder %s969, 511
        %s971 = scalar_select %p970, %s969, 511
        %s972 = smul.addr %s971, 8
        %s973 = scalar_lea.vmem %s2, %s972
      $region44: #{basic_conv3d.2} parent=39 // pred_fallthru
        _
      // Predicated region
      $region45: #{basic_conv3d.2} parent=39 // pred_check
        %p974 = pneg %p112
      $region46: #{basic_conv3d.2} parent=39 // pred_check_branch
        %976 = sbr.rel (%p974) target = $region48
      $region47: #{basic_conv3d.2} parent=39 // pred_region
        %p977 = scmp.lt.s32.totalorder %s16, 7
        %s978 = scalar_select %p977, %s16, 7
        %s979 = smul.addr %s978, 8
        %s980 = scalar_lea.vmem %s3, %s979
      $region48: #{basic_conv3d.2} parent=39 // pred_fallthru
        _
    $region40: #{basic_conv3d.2} parent=5 // pred_fallthru
      _
  $region6: #{basic_conv3d.2} parent=0 // loop_footer
    %s14 = sadd.s32 1, %s10
  $region7: #{basic_conv3d.2} parent=0 // loop_footer_branch
    %9 = sbr.rel target = $region3
  $region8: #{basic_conv3d.2} parent=0 // loop_exit
    _

// kernel: basic_conv3d.3
$region0: #{basic_conv3d.3}
  #allocation0 [shape = 'u32[]', space=smem, size = 0x4, offset = 0x4, fixed_abs, tag = 'smem constant byte address 0x4 - core index']
  #allocation1 [shape = 'u32[72,128]{1,0:T(1,128)}', space=vmem, size = 0x9000, scoped, tag = 'internal scratch']
  %s0 = inlined_call_operand.vmem [shape: f32[4096,128], index: 0, kind: input, shape index: {}, may-alias: {0,3}]
  %s1 = inlined_call_operand.vmem [shape: f32[1,128], index: 1, kind: input, shape index: {}]
  %s2 = inlined_call_operand.vmem [shape: f32[1,128], index: 2, kind: input, shape index: {}]
  %s3 = inlined_call_operand.vmem [shape: f32[4096,128], index: 3, kind: output, shape index: {}, may-alias: {0,3}]
  %s4 = sld [smem:[#allocation0]]
  $region45: #{basic_conv3d.3} parent=0
    _
  %s6 = ssub.s32 1, %s4
  %s7 = scalar_select 0, %s6, %s4
  loop: start=0, step=1, limit=10
  $region2: #{basic_conv3d.3} parent=0 // loop_pre_header
    _
  $region3: #{basic_conv3d.3} parent=0 // loop_header
    %s9 = sphi 0, %s13
    %p10 = scmp.ge.s32.totalorder %s9, 10
    %s19 = sphi 0, %s21
    %s22 = sphi 0, %s19
    %s23 = sphi 0, %s22
    %s39 = sphi 0, %s23
    %s43 = sphi 0, %s43
    %s45 = sphi 0, %s43
    %s46 = sphi 0, %s45
    %s60 = sphi 0, %s46
    %s64 = sphi 0, %s64
    %s66 = sphi 0, %s64
    %s67 = sphi 0, %s66
    %s81 = sphi 0, %s67
    %s87 = sphi 0, %s89
    %s90 = sphi 0, %s87
    %s91 = sphi 0, %s90
    %s107 = sphi 0, %s91
  $region4: #{basic_conv3d.3} parent=0 // loop_header_branch
    %12 = sbr.rel (%p10) target = $region8
  $region5: #{basic_conv3d.3} parent=0 // loop_body
    %s14 = ssub.s32 %s9, 1
    %s15 = ssub.s32 %s9, 2
    %s16 = sadd.s32 %s9, 1
    %s17 = ssub.s32 %s9, %s16
    %p18 = scmp.eq.s32.totalorder %s17, 0
    %s20 = sadd.s32 %s19, 1
    %s21 = scalar_select %p18, %s19, %s20
    %p24 = pneg %p18
    %p25 = scmp.eq.s32.totalorder %s9, 7
    %p26 = por %p24, %p25
    %p27 = scmp.ne.s32.totalorder %s19, %s22
    %p28 = scmp.eq.s32.totalorder %s9, 0
    %p29 = por %p27, %p28
    %p30 = scmp.ne.s32.totalorder %s19, %s22
    %p31 = scmp.eq.s32.totalorder %s14, 7
    %p32 = por %p30, %p31
    %p33 = scmp.ne.s32.totalorder %s22, %s23
    %p34 = scmp.eq.s32.totalorder %s14, 0
    %p35 = por %p33, %p34
    %p36 = scmp.ne.s32.totalorder %s22, %s23
    %p37 = scmp.eq.s32.totalorder %s15, 7
    %p38 = por %p36, %p37
    %p40 = scmp.ne.s32.totalorder %s23, %s39
    %p41 = scmp.eq.s32.totalorder %s15, 0
    %p42 = por %p40, %p41
    %s44 = sadd.s32 %s43, 1
    %p47 = scmp.eq.s32.totalorder %s9, 7
    %p48 = scmp.ne.s32.totalorder %s43, %s45
    %p49 = scmp.eq.s32.totalorder %s9, 0
    %p50 = por %p48, %p49
    %p51 = scmp.ne.s32.totalorder %s43, %s45
    %p52 = scmp.eq.s32.totalorder %s14, 7
    %p53 = por %p51, %p52
    %p54 = scmp.ne.s32.totalorder %s45, %s46
    %p55 = scmp.eq.s32.totalorder %s14, 0
    %p56 = por %p54, %p55
    %p57 = scmp.ne.s32.totalorder %s45, %s46
    %p58 = scmp.eq.s32.totalorder %s15, 7
    %p59 = por %p57, %p58
    %p61 = scmp.ne.s32.totalorder %s46, %s60
    %p62 = scmp.eq.s32.totalorder %s15, 0
    %p63 = por %p61, %p62
    %s65 = sadd.s32 %s64, 1
    %p68 = scmp.eq.s32.totalorder %s9, 7
    %p69 = scmp.ne.s32.totalorder %s64, %s66
    %p70 = scmp.eq.s32.totalorder %s9, 0
    %p71 = por %p69, %p70
    %p72 = scmp.ne.s32.totalorder %s64, %s66
    %p73 = scmp.eq.s32.totalorder %s14, 7
    %p74 = por %p72, %p73
    %p75 = scmp.ne.s32.totalorder %s66, %s67
    %p76 = scmp.eq.s32.totalorder %s14, 0
    %p77 = por %p75, %p76
    %p78 = scmp.ne.s32.totalorder %s66, %s67
    %p79 = scmp.eq.s32.totalorder %s15, 7
    %p80 = por %p78, %p79
    %p82 = scmp.ne.s32.totalorder %s67, %s81
    %p83 = scmp.eq.s32.totalorder %s15, 0
    %p84 = por %p82, %p83
    %s85 = ssub.s32 %s9, %s16
    %p86 = scmp.eq.s32.totalorder %s85, 0
    %s88 = sadd.s32 %s87, 1
    %s89 = scalar_select %p86, %s87, %s88
    %p92 = pneg %p86
    %p93 = scmp.eq.s32.totalorder %s9, 7
    %p94 = por %p92, %p93
    %p95 = scmp.ne.s32.totalorder %s87, %s90
    %p96 = scmp.eq.s32.totalorder %s9, 0
    %p97 = por %p95, %p96
    %p98 = scmp.ne.s32.totalorder %s87, %s90
    %p99 = scmp.eq.s32.totalorder %s14, 7
    %p100 = por %p98, %p99
    %p101 = scmp.ne.s32.totalorder %s90, %s91
    %p102 = scmp.eq.s32.totalorder %s14, 0
    %p103 = por %p101, %p102
    %p104 = scmp.ne.s32.totalorder %s90, %s91
    %p105 = scmp.eq.s32.totalorder %s15, 7
    %p106 = por %p104, %p105
    %p108 = scmp.ne.s32.totalorder %s91, %s107
    %p109 = scmp.eq.s32.totalorder %s15, 0
    %p110 = por %p108, %p109
    %p111 = scmp.le.s32.totalorder 1, %s9
    %p112 = scmp.lt.s32.totalorder %s9, 9
    %p113 = pnand %p111, %p112
    %p114 = pneg %p113
    // Predicated region
    $region9: #{basic_conv3d.3} parent=5 // pred_check
      _
    $region10: #{basic_conv3d.3} parent=5 // pred_check_branch
      %116 = sbr.rel (%p113) target = $region12
    $region11: #{basic_conv3d.3} parent=5 // pred_region
      %s117 = ssub.s32 %s9, 1
      // Predicated region
      $region13: #{basic_conv3d.3} parent=11 // pred_check
        %p118 = pneg %p56
      $region14: #{basic_conv3d.3} parent=11 // pred_check_branch
        %120 = sbr.rel (%p118) target = $region16
      $region15: #{basic_conv3d.3} parent=11 // pred_region
        _
      $region16: #{basic_conv3d.3} parent=11 // pred_fallthru
        _
      // Predicated region
      $region17: #{basic_conv3d.3} parent=11 // pred_check
        %p121 = pneg %p77
      $region18: #{basic_conv3d.3} parent=11 // pred_check_branch
        %123 = sbr.rel (%p121) target = $region20
      $region19: #{basic_conv3d.3} parent=11 // pred_region
        _
      $region20: #{basic_conv3d.3} parent=11 // pred_fallthru
        _
    $region12: #{basic_conv3d.3} parent=5 // pred_fallthru
      _
    %p124 = scmp.lt.s32.totalorder %s9, 8
    // Predicated region
    $region21: #{basic_conv3d.3} parent=5 // pred_check
      %p125 = pneg %p124
    $region22: #{basic_conv3d.3} parent=5 // pred_check_branch
      %127 = sbr.rel (%p125) target = $region24
    $region23: #{basic_conv3d.3} parent=5 // pred_region
      // Predicated region
      $region25: #{basic_conv3d.3} parent=23 // pred_check
        %p128 = pneg %p29
      $region26: #{basic_conv3d.3} parent=23 // pred_check_branch
        %130 = sbr.rel (%p128) target = $region28
      $region27: #{basic_conv3d.3} parent=23 // pred_region
        %s131 = smul.u32 64, %s9
        %p132 = scmp.lt.s32.totalorder %s131, 511
        %s133 = scalar_select %p132, %s131, 511
        %s134 = smul.addr %s133, 8
        %s135 = scalar_lea.vmem %s0, %s134
        %s136 = smul.u32 64, %s9
      $region28: #{basic_conv3d.3} parent=23 // pred_fallthru
        _
    $region24: #{basic_conv3d.3} parent=5 // pred_fallthru
      _
    %p137 = scmp.le.s32.totalorder 1, %s9
    %p138 = scmp.lt.s32.totalorder %s9, 9
    %p139 = pnand %p137, %p138
    %p140 = pneg %p139
    // Predicated region
    $region29: #{basic_conv3d.3} parent=5 // pred_check
      _
    $region30: #{basic_conv3d.3} parent=5 // pred_check_branch
      %142 = sbr.rel (%p139) target = $region32
    $region31: #{basic_conv3d.3} parent=5 // pred_region
      %s143 = ssub.s32 %s9, 1
      %s144 = smul.u32 64, %s14
      %p145 = scmp.lt.s32.totalorder %s144, 511
      %s146 = scalar_select %p145, %s144, 511
      %s147 = smul.addr %s146, 8
      %s148 = scalar_lea.vmem %s0, %s147
      %p149 = pneg %p35
      %p150 = pneg %p32
      %p151 = pneg %p56
      %p152 = pneg %p53
      %p153 = pneg %p77
      %p154 = pneg %p74
      %p155 = pneg %p103
      %p156 = pneg %p100
      %s157 = smul.u32 64, %s14
      %p158 = scmp.lt.s32.totalorder %s157, 511
      %s159 = scalar_select %p158, %s157, 511
      %s160 = smul.addr %s159, 8
      %s161 = scalar_lea.vmem %s3, %s160
      %s162 = smul.u32 64, %s14
      %p163 = scmp.lt.s32.totalorder %s162, 511
      %s164 = scalar_select %p163, %s162, 511
      %s165 = smul.addr %s164, 8
      %s166 = scalar_lea.vmem %s0, %s165
      %s167 = smul.u32 64, %s14
      %s168 = smul.u32 64, %s14
      %p169 = scmp.lt.s32.totalorder %s168, 511
      %s170 = scalar_select %p169, %s168, 511
      %s171 = smul.addr %s170, 8
      %s172 = scalar_lea.vmem %s3, %s171
      %s173 = smul.u32 64, %s14
      %v174 = vld [vmem:[%s166] sm:$0xff]
      %v175 = vld [vmem:[%s166 + $0x8] sm:$0xff]
      %v176 = vld [vmem:[%s166 + $0x10] sm:$0xff]
      %v177 = vld [vmem:[%s166 + $0x18] sm:$0xff]
      %v178 = vld [vmem:[%s166 + $0x20] sm:$0xff]
      %v179 = vld [vmem:[%s166 + $0x28] sm:$0xff]
      %v180 = vld [vmem:[%s166 + $0x30] sm:$0xff]
      %v181 = vld [vmem:[%s166 + $0x38] sm:$0xff]
      %v182 = vld [vmem:[%s166 + $0x40] sm:$0xff]
      %v183 = vld [vmem:[%s166 + $0x48] sm:$0xff]
      %v184 = vld [vmem:[%s166 + $0x50] sm:$0xff]
      %v185 = vld [vmem:[%s166 + $0x58] sm:$0xff]
      %v186 = vld [vmem:[%s166 + $0x60] sm:$0xff]
      %v187 = vld [vmem:[%s166 + $0x68] sm:$0xff]
      %v188 = vld [vmem:[%s166 + $0x70] sm:$0xff]
      %v189 = vld [vmem:[%s166 + $0x78] sm:$0xff]
      %v190 = vld [vmem:[%s166 + $0x80] sm:$0xff]
      %v191 = vld [vmem:[%s166 + $0x88] sm:$0xff]
      %v192 = vld [vmem:[%s166 + $0x90] sm:$0xff]
      %v193 = vld [vmem:[%s166 + $0x98] sm:$0xff]
      %v194 = vld [vmem:[%s166 + $0xa0] sm:$0xff]
      %v195 = vld [vmem:[%s166 + $0xa8] sm:$0xff]
      %v196 = vld [vmem:[%s166 + $0xb0] sm:$0xff]
      %v197 = vld [vmem:[%s166 + $0xb8] sm:$0xff]
      %v198 = vld [vmem:[%s166 + $0xc0] sm:$0xff]
      %v199 = vld [vmem:[%s166 + $0xc8] sm:$0xff]
      %v200 = vld [vmem:[%s166 + $0xd0] sm:$0xff]
      %v201 = vld [vmem:[%s166 + $0xd8] sm:$0xff]
      %v202 = vld [vmem:[%s166 + $0xe0] sm:$0xff]
      %v203 = vld [vmem:[%s166 + $0xe8] sm:$0xff]
      %v204 = vld [vmem:[%s166 + $0xf0] sm:$0xff]
      %v205 = vld [vmem:[%s166 + $0xf8] sm:$0xff]
      %v206 = vld [vmem:[%s166 + $0x100] sm:$0xff]
      %v207 = vld [vmem:[%s166 + $0x108] sm:$0xff]
      %v208 = vld [vmem:[%s166 + $0x110] sm:$0xff]
      %v209 = vld [vmem:[%s166 + $0x118] sm:$0xff]
      %v210 = vld [vmem:[%s166 + $0x120] sm:$0xff]
      %v211 = vld [vmem:[%s166 + $0x128] sm:$0xff]
      %v212 = vld [vmem:[%s166 + $0x130] sm:$0xff]
      %v213 = vld [vmem:[%s166 + $0x138] sm:$0xff]
      %v214 = vld [vmem:[%s166 + $0x140] sm:$0xff]
      %v215 = vld [vmem:[%s166 + $0x148] sm:$0xff]
      %v216 = vld [vmem:[%s166 + $0x150] sm:$0xff]
      %v217 = vld [vmem:[%s166 + $0x158] sm:$0xff]
      %v218 = vld [vmem:[%s166 + $0x160] sm:$0xff]
      %v219 = vld [vmem:[%s166 + $0x168] sm:$0xff]
      %v220 = vld [vmem:[%s166 + $0x170] sm:$0xff]
      %v221 = vld [vmem:[%s166 + $0x178] sm:$0xff]
      %v222 = vld [vmem:[%s166 + $0x180] sm:$0xff]
      %v223 = vld [vmem:[%s166 + $0x188] sm:$0xff]
      %v224 = vld [vmem:[%s166 + $0x190] sm:$0xff]
      %v225 = vld [vmem:[%s166 + $0x198] sm:$0xff]
      %v226 = vld [vmem:[%s166 + $0x1a0] sm:$0xff]
      %v227 = vld [vmem:[%s166 + $0x1a8] sm:$0xff]
      %v228 = vld [vmem:[%s166 + $0x1b0] sm:$0xff]
      %v229 = vld [vmem:[%s166 + $0x1b8] sm:$0xff]
      %v230 = vld [vmem:[%s166 + $0x1c0] sm:$0xff]
      %v231 = vld [vmem:[%s166 + $0x1c8] sm:$0xff]
      %v232 = vld [vmem:[%s166 + $0x1d0] sm:$0xff]
      %v233 = vld [vmem:[%s166 + $0x1d8] sm:$0xff]
      %v234 = vld [vmem:[%s166 + $0x1e0] sm:$0xff]
      %v235 = vld [vmem:[%s166 + $0x1e8] sm:$0xff]
      %v236 = vld [vmem:[%s166 + $0x1f0] sm:$0xff]
      %v237 = vld [vmem:[%s166 + $0x1f8] sm:$0xff]
      %v238 = vld [vmem:[%s1] sm:$0x1]
      %v240 = vperm.slane %v238, 0
      %v242 = vmul.f32 %v174, %v240
      %v243 = vmul.f32 %v175, %v240
      %v244 = vmul.f32 %v176, %v240
      %v245 = vmul.f32 %v177, %v240
      %v246 = vmul.f32 %v178, %v240
      %v247 = vmul.f32 %v179, %v240
      %v248 = vmul.f32 %v180, %v240
      %v249 = vmul.f32 %v181, %v240
      %v250 = vmul.f32 %v182, %v240
      %v251 = vmul.f32 %v183, %v240
      %v252 = vmul.f32 %v184, %v240
      %v253 = vmul.f32 %v185, %v240
      %v254 = vmul.f32 %v186, %v240
      %v255 = vmul.f32 %v187, %v240
      %v256 = vmul.f32 %v188, %v240
      %v257 = vmul.f32 %v189, %v240
      %v258 = vmul.f32 %v190, %v240
      %v259 = vmul.f32 %v191, %v240
      %v260 = vmul.f32 %v192, %v240
      %v261 = vmul.f32 %v193, %v240
      %v262 = vmul.f32 %v194, %v240
      %v263 = vmul.f32 %v195, %v240
      %v264 = vmul.f32 %v196, %v240
      %v265 = vmul.f32 %v197, %v240
      %v266 = vmul.f32 %v198, %v240
      %v267 = vmul.f32 %v199, %v240
      %v268 = vmul.f32 %v200, %v240
      %v269 = vmul.f32 %v201, %v240
      %v270 = vmul.f32 %v202, %v240
      %v271 = vmul.f32 %v203, %v240
      %v272 = vmul.f32 %v204, %v240
      %v273 = vmul.f32 %v205, %v240
      %v274 = vmul.f32 %v206, %v240
      %v275 = vmul.f32 %v207, %v240
      %v276 = vmul.f32 %v208, %v240
      %v277 = vmul.f32 %v209, %v240
      %v278 = vmul.f32 %v210, %v240
      %v279 = vmul.f32 %v211, %v240
      %v280 = vmul.f32 %v212, %v240
      %v281 = vmul.f32 %v213, %v240
      %v282 = vmul.f32 %v214, %v240
      %v283 = vmul.f32 %v215, %v240
      %v284 = vmul.f32 %v216, %v240
      %v285 = vmul.f32 %v217, %v240
      %v286 = vmul.f32 %v218, %v240
      %v287 = vmul.f32 %v219, %v240
      %v288 = vmul.f32 %v220, %v240
      %v289 = vmul.f32 %v221, %v240
      %v290 = vmul.f32 %v222, %v240
      %v291 = vmul.f32 %v223, %v240
      %v292 = vmul.f32 %v224, %v240
      %v293 = vmul.f32 %v225, %v240
      %v294 = vmul.f32 %v226, %v240
      %v295 = vmul.f32 %v227, %v240
      %v296 = vmul.f32 %v228, %v240
      %v297 = vmul.f32 %v229, %v240
      %v298 = vmul.f32 %v230, %v240
      %v299 = vmul.f32 %v231, %v240
      %v300 = vmul.f32 %v232, %v240
      %v301 = vmul.f32 %v233, %v240
      %v302 = vmul.f32 %v234, %v240
      %v303 = vmul.f32 %v235, %v240
      %v304 = vmul.f32 %v236, %v240
      %v305 = vmul.f32 %v237, %v240
      %v306 = vld [vmem:[%s2] sm:$0x1]
      %v308 = vperm.slane %v306, 0
      %v310 = vadd.f32 %v242, %v308
      %v311 = vadd.f32 %v243, %v308
      %v312 = vadd.f32 %v244, %v308
      %v313 = vadd.f32 %v245, %v308
      %v314 = vadd.f32 %v246, %v308
      %v315 = vadd.f32 %v247, %v308
      %v316 = vadd.f32 %v248, %v308
      %v317 = vadd.f32 %v249, %v308
      %v318 = vadd.f32 %v250, %v308
      %v319 = vadd.f32 %v251, %v308
      %v320 = vadd.f32 %v252, %v308
      %v321 = vadd.f32 %v253, %v308
      %v322 = vadd.f32 %v254, %v308
      %v323 = vadd.f32 %v255, %v308
      %v324 = vadd.f32 %v256, %v308
      %v325 = vadd.f32 %v257, %v308
      %v326 = vadd.f32 %v258, %v308
      %v327 = vadd.f32 %v259, %v308
      %v328 = vadd.f32 %v260, %v308
      %v329 = vadd.f32 %v261, %v308
      %v330 = vadd.f32 %v262, %v308
      %v331 = vadd.f32 %v263, %v308
      %v332 = vadd.f32 %v264, %v308
      %v333 = vadd.f32 %v265, %v308
      %v334 = vadd.f32 %v266, %v308
      %v335 = vadd.f32 %v267, %v308
      %v336 = vadd.f32 %v268, %v308
      %v337 = vadd.f32 %v269, %v308
      %v338 = vadd.f32 %v270, %v308
      %v339 = vadd.f32 %v271, %v308
      %v340 = vadd.f32 %v272, %v308
      %v341 = vadd.f32 %v273, %v308
      %v342 = vadd.f32 %v274, %v308
      %v343 = vadd.f32 %v275, %v308
      %v344 = vadd.f32 %v276, %v308
      %v345 = vadd.f32 %v277, %v308
      %v346 = vadd.f32 %v278, %v308
      %v347 = vadd.f32 %v279, %v308
      %v348 = vadd.f32 %v280, %v308
      %v349 = vadd.f32 %v281, %v308
      %v350 = vadd.f32 %v282, %v308
      %v351 = vadd.f32 %v283, %v308
      %v352 = vadd.f32 %v284, %v308
      %v353 = vadd.f32 %v285, %v308
      %v354 = vadd.f32 %v286, %v308
      %v355 = vadd.f32 %v287, %v308
      %v356 = vadd.f32 %v288, %v308
      %v357 = vadd.f32 %v289, %v308
      %v358 = vadd.f32 %v290, %v308
      %v359 = vadd.f32 %v291, %v308
      %v360 = vadd.f32 %v292, %v308
      %v361 = vadd.f32 %v293, %v308
      %v362 = vadd.f32 %v294, %v308
      %v363 = vadd.f32 %v295, %v308
      %v364 = vadd.f32 %v296, %v308
      %v365 = vadd.f32 %v297, %v308
      %v366 = vadd.f32 %v298, %v308
      %v367 = vadd.f32 %v299, %v308
      %v368 = vadd.f32 %v300, %v308
      %v369 = vadd.f32 %v301, %v308
      %v370 = vadd.f32 %v302, %v308
      %v371 = vadd.f32 %v303, %v308
      %v372 = vadd.f32 %v304, %v308
      %v373 = vadd.f32 %v305, %v308
      %v374 = vmax.f32 %v310, 0.0
      %v375 = vmax.f32 %v311, 0.0
      %v376 = vmax.f32 %v312, 0.0
      %v377 = vmax.f32 %v313, 0.0
      %v378 = vmax.f32 %v314, 0.0
      %v379 = vmax.f32 %v315, 0.0
      %v380 = vmax.f32 %v316, 0.0
      %v381 = vmax.f32 %v317, 0.0
      %v382 = vmax.f32 %v318, 0.0
      %v383 = vmax.f32 %v319, 0.0
      %v384 = vmax.f32 %v320, 0.0
      %v385 = vmax.f32 %v321, 0.0
      %v386 = vmax.f32 %v322, 0.0
      %v387 = vmax.f32 %v323, 0.0
      %v388 = vmax.f32 %v324, 0.0
      %v389 = vmax.f32 %v325, 0.0
      %v390 = vmax.f32 %v326, 0.0
      %v391 = vmax.f32 %v327, 0.0
      %v392 = vmax.f32 %v328, 0.0
      %v393 = vmax.f32 %v329, 0.0
      %v394 = vmax.f32 %v330, 0.0
      %v395 = vmax.f32 %v331, 0.0
      %v396 = vmax.f32 %v332, 0.0
      %v397 = vmax.f32 %v333, 0.0
      %v398 = vmax.f32 %v334, 0.0
      %v399 = vmax.f32 %v335, 0.0
      %v400 = vmax.f32 %v336, 0.0
      %v401 = vmax.f32 %v337, 0.0
      %v402 = vmax.f32 %v338, 0.0
      %v403 = vmax.f32 %v339, 0.0
      %v404 = vmax.f32 %v340, 0.0
      %v405 = vmax.f32 %v341, 0.0
      %v406 = vmax.f32 %v342, 0.0
      %v407 = vmax.f32 %v343, 0.0
      %v408 = vmax.f32 %v344, 0.0
      %v409 = vmax.f32 %v345, 0.0
      %v410 = vmax.f32 %v346, 0.0
      %v411 = vmax.f32 %v347, 0.0
      %v412 = vmax.f32 %v348, 0.0
      %v413 = vmax.f32 %v349, 0.0
      %v414 = vmax.f32 %v350, 0.0
      %v415 = vmax.f32 %v351, 0.0
      %v416 = vmax.f32 %v352, 0.0
      %v417 = vmax.f32 %v353, 0.0
      %v418 = vmax.f32 %v354, 0.0
      %v419 = vmax.f32 %v355, 0.0
      %v420 = vmax.f32 %v356, 0.0
      %v421 = vmax.f32 %v357, 0.0
      %v422 = vmax.f32 %v358, 0.0
      %v423 = vmax.f32 %v359, 0.0
      %v424 = vmax.f32 %v360, 0.0
      %v425 = vmax.f32 %v361, 0.0
      %v426 = vmax.f32 %v362, 0.0
      %v427 = vmax.f32 %v363, 0.0
      %v428 = vmax.f32 %v364, 0.0
      %v429 = vmax.f32 %v365, 0.0
      %v430 = vmax.f32 %v366, 0.0
      %v431 = vmax.f32 %v367, 0.0
      %v432 = vmax.f32 %v368, 0.0
      %v433 = vmax.f32 %v369, 0.0
      %v434 = vmax.f32 %v370, 0.0
      %v435 = vmax.f32 %v371, 0.0
      %v436 = vmax.f32 %v372, 0.0
      %v437 = vmax.f32 %v373, 0.0
      %438 = vst [vmem:[%s172] sm:$0xff] %v374
      %439 = vst [vmem:[%s172 + $0x8] sm:$0xff] %v375
      %440 = vst [vmem:[%s172 + $0x10] sm:$0xff] %v376
      %441 = vst [vmem:[%s172 + $0x18] sm:$0xff] %v377
      %442 = vst [vmem:[%s172 + $0x20] sm:$0xff] %v378
      %443 = vst [vmem:[%s172 + $0x28] sm:$0xff] %v379
      %444 = vst [vmem:[%s172 + $0x30] sm:$0xff] %v380
      %445 = vst [vmem:[%s172 + $0x38] sm:$0xff] %v381
      %446 = vst [vmem:[%s172 + $0x40] sm:$0xff] %v382
      %447 = vst [vmem:[%s172 + $0x48] sm:$0xff] %v383
      %448 = vst [vmem:[%s172 + $0x50] sm:$0xff] %v384
      %449 = vst [vmem:[%s172 + $0x58] sm:$0xff] %v385
      %450 = vst [vmem:[%s172 + $0x60] sm:$0xff] %v386
      %451 = vst [vmem:[%s172 + $0x68] sm:$0xff] %v387
      %452 = vst [vmem:[%s172 + $0x70] sm:$0xff] %v388
      %453 = vst [vmem:[%s172 + $0x78] sm:$0xff] %v389
      %454 = vst [vmem:[%s172 + $0x80] sm:$0xff] %v390
      %455 = vst [vmem:[%s172 + $0x88] sm:$0xff] %v391
      %456 = vst [vmem:[%s172 + $0x90] sm:$0xff] %v392
      %457 = vst [vmem:[%s172 + $0x98] sm:$0xff] %v393
      %458 = vst [vmem:[%s172 + $0xa0] sm:$0xff] %v394
      %459 = vst [vmem:[%s172 + $0xa8] sm:$0xff] %v395
      %460 = vst [vmem:[%s172 + $0xb0] sm:$0xff] %v396
      %461 = vst [vmem:[%s172 + $0xb8] sm:$0xff] %v397
      %462 = vst [vmem:[%s172 + $0xc0] sm:$0xff] %v398
      %463 = vst [vmem:[%s172 + $0xc8] sm:$0xff] %v399
      %464 = vst [vmem:[%s172 + $0xd0] sm:$0xff] %v400
      %465 = vst [vmem:[%s172 + $0xd8] sm:$0xff] %v401
      %466 = vst [vmem:[%s172 + $0xe0] sm:$0xff] %v402
      %467 = vst [vmem:[%s172 + $0xe8] sm:$0xff] %v403
      %468 = vst [vmem:[%s172 + $0xf0] sm:$0xff] %v404
      %469 = vst [vmem:[%s172 + $0xf8] sm:$0xff] %v405
      %470 = vst [vmem:[%s172 + $0x100] sm:$0xff] %v406
      %471 = vst [vmem:[%s172 + $0x108] sm:$0xff] %v407
      %472 = vst [vmem:[%s172 + $0x110] sm:$0xff] %v408
      %473 = vst [vmem:[%s172 + $0x118] sm:$0xff] %v409
      %474 = vst [vmem:[%s172 + $0x120] sm:$0xff] %v410
      %475 = vst [vmem:[%s172 + $0x128] sm:$0xff] %v411
      %476 = vst [vmem:[%s172 + $0x130] sm:$0xff] %v412
      %477 = vst [vmem:[%s172 + $0x138] sm:$0xff] %v413
      %478 = vst [vmem:[%s172 + $0x140] sm:$0xff] %v414
      %479 = vst [vmem:[%s172 + $0x148] sm:$0xff] %v415
      %480 = vst [vmem:[%s172 + $0x150] sm:$0xff] %v416
      %481 = vst [vmem:[%s172 + $0x158] sm:$0xff] %v417
      %482 = vst [vmem:[%s172 + $0x160] sm:$0xff] %v418
      %483 = vst [vmem:[%s172 + $0x168] sm:$0xff] %v419
      %484 = vst [vmem:[%s172 + $0x170] sm:$0xff] %v420
      %485 = vst [vmem:[%s172 + $0x178] sm:$0xff] %v421
      %486 = vst [vmem:[%s172 + $0x180] sm:$0xff] %v422
      %487 = vst [vmem:[%s172 + $0x188] sm:$0xff] %v423
      %488 = vst [vmem:[%s172 + $0x190] sm:$0xff] %v424
      %489 = vst [vmem:[%s172 + $0x198] sm:$0xff] %v425
      %490 = vst [vmem:[%s172 + $0x1a0] sm:$0xff] %v426
      %491 = vst [vmem:[%s172 + $0x1a8] sm:$0xff] %v427
      %492 = vst [vmem:[%s172 + $0x1b0] sm:$0xff] %v428
      %493 = vst [vmem:[%s172 + $0x1b8] sm:$0xff] %v429
      %494 = vst [vmem:[%s172 + $0x1c0] sm:$0xff] %v430
      %495 = vst [vmem:[%s172 + $0x1c8] sm:$0xff] %v431
      %496 = vst [vmem:[%s172 + $0x1d0] sm:$0xff] %v432
      %497 = vst [vmem:[%s172 + $0x1d8] sm:$0xff] %v433
      %498 = vst [vmem:[%s172 + $0x1e0] sm:$0xff] %v434
      %499 = vst [vmem:[%s172 + $0x1e8] sm:$0xff] %v435
      %500 = vst [vmem:[%s172 + $0x1f0] sm:$0xff] %v436
      %501 = vst [vmem:[%s172 + $0x1f8] sm:$0xff] %v437
      %s502 = smul.u32 64, %s14
      %p503 = scmp.lt.s32.totalorder %s502, 511
      %s504 = scalar_select %p503, %s502, 511
      %s505 = smul.addr %s504, 8
      %s506 = scalar_lea.vmem %s3, %s505
      // Predicated region
      $region33: #{basic_conv3d.3} parent=31 // pred_check
        %p507 = pneg %p100
      $region34: #{basic_conv3d.3} parent=31 // pred_check_branch
        %509 = sbr.rel (%p507) target = $region36
      $region35: #{basic_conv3d.3} parent=31 // pred_region
        %s510 = smul.u32 64, %s14
      $region36: #{basic_conv3d.3} parent=31 // pred_fallthru
        _
    $region32: #{basic_conv3d.3} parent=5 // pred_fallthru
      _
    %p511 = scmp.le.s32.totalorder 2, %s9
    // Predicated region
    $region37: #{basic_conv3d.3} parent=5 // pred_check
      %p512 = pneg %p511
    $region38: #{basic_conv3d.3} parent=5 // pred_check_branch
      %514 = sbr.rel (%p512) target = $region40
    $region39: #{basic_conv3d.3} parent=5 // pred_region
      %s515 = ssub.s32 %s9, 2
      // Predicated region
      $region41: #{basic_conv3d.3} parent=39 // pred_check
        %p516 = pneg %p106
      $region42: #{basic_conv3d.3} parent=39 // pred_check_branch
        %518 = sbr.rel (%p516) target = $region44
      $region43: #{basic_conv3d.3} parent=39 // pred_region
        %s519 = smul.u32 64, %s15
        %p520 = scmp.lt.s32.totalorder %s519, 511
        %s521 = scalar_select %p520, %s519, 511
        %s522 = smul.addr %s521, 8
        %s523 = scalar_lea.vmem %s3, %s522
      $region44: #{basic_conv3d.3} parent=39 // pred_fallthru
        _
    $region40: #{basic_conv3d.3} parent=5 // pred_fallthru
      _
  $region6: #{basic_conv3d.3} parent=0 // loop_footer
    %s13 = sadd.s32 1, %s9
  $region7: #{basic_conv3d.3} parent=0 // loop_footer_branch
    %8 = sbr.rel target = $region3
  $region8: #{basic_conv3d.3} parent=0 // loop_exit
    _

</llo_original>
